<compile_context>
chip_gen: v6e
topology: v6e:2x2x1
jax: 0.10.0
libtpu: 0.0.40
codegen_flags: <defaults>
</compile_context>

<pallas_src>
import functools

import jax
import jax.numpy as jnp
import numpy as np
from jax.experimental import pallas as pl
from jax.experimental.pallas import tpu as pltpu


# ----------------------------- fused Pallas kernel -------------------------- #

def tcn_fused_kernel(x_ref, *refs, layers, kernel_size, seq_len):
    """Fused TCN forward for one batch element (channels-last, time on sublanes).

    x_ref : (1, L, C_in)
    refs  : per layer  w (K, Cin, Cout), b (1, Cout)      [x2 convs]
            [+ wd (Cin, Cout), bd (1, Cout) if downsample]
            then head  wl (C_last, O), bl (1, O)
            last ref is the output o_ref (1, 1, O)
    """
    o_ref = refs[-1]
    params = refs[:-1]

    h = x_ref[0]                                         # (L, C_in) f32

    # Hoisted causal masks: one compare per distinct nonzero shift, shared by
    # both convs of a layer and every tap that uses that shift.
    t = jax.lax.broadcasted_iota(jnp.int32, (seq_len, 1), 0)
    shifts = sorted({l["dilation"] * (kernel_size - 1 - k)
                     for l in layers for k in range(kernel_size)} - {0})
    masks = {s: t >= s for s in shifts}

    def dilated_causal_conv(inp, w_ref, b_ref, dilation):
        """y[t] = b + sum_k inp[t - d*(K-1-k)] @ W_k  (per-tap matmul accumulation)."""
        cout = w_ref.shape[-1]
        acc = jnp.zeros((seq_len, cout), jnp.float32) + b_ref[...]
        for k in range(kernel_size):                     # static unroll over taps
            shift = dilation * (kernel_size - 1 - k)
            if shift == 0:
                tap = inp
            else:
                # sublane rotate (XLU) + zero rows that would wrap past t = 0
                tap = jnp.where(masks[shift],
                                pltpu.roll(inp, shift=shift, axis=0), 0.0)
            # TODO(synk): at realistic channel widths (>=64) cast tap / W_k to bf16
            # for the MXU (keep f32 accumulation and f32 elementwise work).
            acc = acc + jnp.dot(tap, w_ref[k], preferred_element_type=jnp.float32)
        return acc

    i = 0
    for layer in layers:
        d = layer["dilation"]
        w1, b1, w2, b2 = params[i], params[i + 1], params[i + 2], params[i + 3]
        i += 4
        # nn.Dropout layers are identity in eval mode.
        h1 = jnp.maximum(dilated_causal_conv(h, w1, b1, d), 0.0)
        h2 = jnp.maximum(dilated_causal_conv(h1, w2, b2, d), 0.0)
        if layer["downsample"]:
            wd, bd = params[i], params[i + 1]
            i += 2
            res = jnp.dot(h, wd[...], preferred_element_type=jnp.float32) + bd[...]
        else:
            res = h
        h = jnp.maximum(h2 + res, 0.0)

    # head: Linear on the last time step + numerically stable log_softmax
    wl, bl = params[i], params[i + 1]
    h_last = h[seq_len - 1:seq_len, :]                   # (1, C_last), single row
    logits = jnp.dot(h_last, wl[...], preferred_element_type=jnp.float32) + bl[...]
    m = jnp.max(logits, axis=-1, keepdims=True)
    s = logits - m
    lse = jnp.log(jnp.sum(jnp.exp(s), axis=-1, keepdims=True))
    # NOTE: O=6 lanes -> masked store; only pad to a lane-dense block if O scales.
    o_ref[...] = (s - lse).reshape(o_ref.shape)


# ------------------------------ wrappers ------------------------------------ #

def _const_index_map(ndim):
    zeros = (0,) * ndim
    return lambda b: zeros


def prepare_params(conv_params, head_params, kernel_size):
    """One-time reshape of PyTorch-layout params into the kernel's layout."""
    flat, meta = [], []
    for p in conv_params:
        cout, cin, K = p["w1"].shape
        assert K == kernel_size
        # (Cout, Cin, K) -> (K, Cin, Cout): tap-major so the kernel indexes w[k]
        w1 = jnp.transpose(p["w1"], (2, 1, 0))
        w2 = jnp.transpose(p["w2"], (2, 1, 0))
        flat += [w1, p["b1"][None, :], w2, p["b2"][None, :]]
        downsample = p["wd"] is not None
        if downsample:
            flat += [jnp.transpose(p["wd"]), p["bd"][None, :]]   # (Cin, Cout)
        meta.append(dict(dilation=p["dilation"], downsample=downsample))
    wl, bl = head_params
    flat += [jnp.transpose(wl), bl[None, :]]                     # (C_last, O)
    return tuple(flat), tuple(meta)


def make_tcn_forward(meta, kernel_size, n, cin, seq_len, out_size):
    kernel = functools.partial(tcn_fused_kernel, layers=meta,
                               kernel_size=kernel_size, seq_len=seq_len)

    def fwd(x_ncl, flat_params):
        # (N, C_in, L) -> (N, L, C_in): channels on lanes, time on sublanes.
        x = jnp.transpose(x_ncl, (0, 2, 1))
        inputs = (x,) + tuple(flat_params)
        in_specs = [pl.BlockSpec((1, seq_len, cin), lambda b: (b, 0, 0))]
        in_specs += [pl.BlockSpec(p.shape, _const_index_map(p.ndim))
                     for p in flat_params]
        out = pl.pallas_call(
            kernel,
            out_shape=jax.ShapeDtypeStruct((n, 1, out_size), jnp.float32),
            grid_spec=pltpu.PrefetchScalarGridSpec(
                num_scalar_prefetch=0,
                grid=(n,),                     # one program per batch element
                in_specs=in_specs,
                out_specs=pl.BlockSpec((1, 1, out_size), lambda b: (b, 0, 0)),
            ),
            compiler_params=pltpu.CompilerParams(
                dimension_semantics=("parallel",),      # megacore split on v7x
                vmem_limit_bytes=32 * 1024 * 1024),
        )(*inputs)
        return out.reshape(n, out_size)

    # TODO(synk): for long L / wide channels, tile L inside each program with a
    # dilation*(K-1) halo, re-derive the VMEM budget for v7x's 64 MiB, and consider
    # the transposed (C, L) layout (time on lanes) for lane-dense elementwise work.
    return jax.jit(fwd)


# -------------------------- deterministic parameters ------------------------ #

def init_params(key, input_size, output_size, num_channels, kernel_size):
    """Mirrors TemporalConvNet.__init__ shapes; weight_norm applied at init time."""
    conv_params = []
    cin = input_size
    for i, cout in enumerate(num_channels):
        key, k1, k2, k3, k4, k5, k6, k7, k8 = jax.random.split(key, 9)

        def wn_conv(kv, kg, kb, co, ci):
            v = 0.1 * jax.random.normal(kv, (co, ci, kernel_size), jnp.float32)
            g = 1.0 + 0.1 * jax.random.normal(kg, (co,), jnp.float32)
            w = g[:, None, None] * v / jnp.sqrt(
                jnp.sum(v * v, axis=(1, 2), keepdims=True))
            b = 0.1 * jax.random.normal(kb, (co,), jnp.float32)
            return w, b                          # torch layout (Cout, Cin, K)

        w1, b1 = wn_conv(k1, k2, k3, cout, cin)
        w2, b2 = wn_conv(k4, k5, k6, cout, cout)
        if cin != cout:                          # nn.Conv1d(cin, cout, 1)
            wd = 0.1 * jax.random.normal(k7, (cout, cin), jnp.float32)
            bd = 0.1 * jax.random.normal(k8, (cout,), jnp.float32)
        else:
            wd, bd = None, None
        conv_params.append(dict(w1=w1, b1=b1, w2=w2, b2=b2, wd=wd, bd=bd,
                                dilation=2 ** i))
        cin = cout

    key, kw, kb = jax.random.split(key, 3)
    wl = 0.1 * jax.random.normal(kw, (output_size, num_channels[-1]), jnp.float32)
    bl = 0.1 * jax.random.normal(kb, (output_size,), jnp.float32)
    return conv_params, (wl, bl)


# ------------------------------ pure-JAX reference --------------------------- #

def ref_forward(x_ncl, conv_params, head_params, kernel_size):
    h = x_ncl
    for p in conv_params:
        d = p["dilation"]
        pad = (kernel_size - 1) * d

        def conv(inp, w, b, d=d, pad=pad):
            y = jax.lax.conv_general_dilated(
                inp, w, window_strides=(1,), padding=[(pad, pad)],
                rhs_dilation=(d,), dimension_numbers=("NCH", "OIH", "NCH"))
            return y[:, :, :inp.shape[2]] + b[None, :, None]   # chomp

        out = jax.nn.relu(conv(h, p["w1"], p["b1"]))
        out = jax.nn.relu(conv(out, p["w2"], p["b2"]))
        if p["wd"] is None:
            res = h
        else:
            res = jnp.einsum("ncl,oc->nol", h, p["wd"]) + p["bd"][None, :, None]
        h = jax.nn.relu(out + res)
    wl, bl = head_params
    logits = h[:, :, -1] @ wl.T + bl
    return jax.nn.log_softmax(logits, axis=1)


# ------------------------------------ main ---------------------------------- #

if __name__ == "__main__":
    key = jax.random.PRNGKey(0)
    N, input_size, L = 2, 4, 16
    num_channels = [8, 8]
    kernel_size = 2
    output_size = 6
    # dropout=0.0 (eval-mode forward; dropout is identity)

    pkey, xkey = jax.random.split(key)
    conv_params, head_params = init_params(
        pkey, input_size, output_size, num_channels, kernel_size)
    x = jax.random.normal(xkey, (N, input_size, L), jnp.float32)   # (N, C_in, L_in)

    flat_params, meta = prepare_params(conv_params, head_params, kernel_size)
    tcn_forward = make_tcn_forward(meta, kernel_size, N, input_size, L, output_size)

    out = tcn_forward(x, flat_params)
    out = jax.block_until_ready(out)

    ref = ref_forward(x, conv_params, head_params, kernel_size)
    np.testing.assert_allclose(np.asarray(out), np.asarray(ref),
                               atol=1e-4, rtol=1e-4)
    print("KERNEL_OK")
</pallas_src>

<mosaic_0001>
module attributes {stable_mosaic.version = 11 : i64} {
  func.func @tcn_fused_kernel(%arg0: i32, %arg1: memref<1x16x4xf32, #tpu.memory_space<vmem>>, %arg2: memref<2x4x8xf32, #tpu.memory_space<vmem>>, %arg3: memref<1x8xf32, #tpu.memory_space<vmem>>, %arg4: memref<2x8x8xf32, #tpu.memory_space<vmem>>, %arg5: memref<1x8xf32, #tpu.memory_space<vmem>>, %arg6: memref<4x8xf32, #tpu.memory_space<vmem>>, %arg7: memref<1x8xf32, #tpu.memory_space<vmem>>, %arg8: memref<2x8x8xf32, #tpu.memory_space<vmem>>, %arg9: memref<1x8xf32, #tpu.memory_space<vmem>>, %arg10: memref<2x8x8xf32, #tpu.memory_space<vmem>>, %arg11: memref<1x8xf32, #tpu.memory_space<vmem>>, %arg12: memref<8x6xf32, #tpu.memory_space<vmem>>, %arg13: memref<1x6xf32, #tpu.memory_space<vmem>>, %arg14: memref<1x1x6xf32, #tpu.memory_space<vmem>>) attributes {dimension_semantics = [#tpu.dimension_semantics<parallel>], iteration_bounds = array<i64: 2>, scalar_prefetch = 0 : i64, scratch_operands = 0 : i64, tpu.core_type = #tpu.core_type<tc>, window_params = [{transform_indices = @transform_0, window_bounds = array<i64: 1, 16, 4>}, {pipeline_mode = #tpu.pipeline_mode<synchronous>, transform_indices = @transform_1, window_bounds = array<i64: 2, 4, 8>}, {pipeline_mode = #tpu.pipeline_mode<synchronous>, transform_indices = @transform_2, window_bounds = array<i64: 1, 8>}, {pipeline_mode = #tpu.pipeline_mode<synchronous>, transform_indices = @transform_3, window_bounds = array<i64: 2, 8, 8>}, {pipeline_mode = #tpu.pipeline_mode<synchronous>, transform_indices = @transform_4, window_bounds = array<i64: 1, 8>}, {pipeline_mode = #tpu.pipeline_mode<synchronous>, transform_indices = @transform_5, window_bounds = array<i64: 4, 8>}, {pipeline_mode = #tpu.pipeline_mode<synchronous>, transform_indices = @transform_6, window_bounds = array<i64: 1, 8>}, {pipeline_mode = #tpu.pipeline_mode<synchronous>, transform_indices = @transform_7, window_bounds = array<i64: 2, 8, 8>}, {pipeline_mode = #tpu.pipeline_mode<synchronous>, transform_indices = @transform_8, window_bounds = array<i64: 1, 8>}, {pipeline_mode = #tpu.pipeline_mode<synchronous>, transform_indices = @transform_9, window_bounds = array<i64: 2, 8, 8>}, {pipeline_mode = #tpu.pipeline_mode<synchronous>, transform_indices = @transform_10, window_bounds = array<i64: 1, 8>}, {pipeline_mode = #tpu.pipeline_mode<synchronous>, transform_indices = @transform_11, window_bounds = array<i64: 8, 6>}, {pipeline_mode = #tpu.pipeline_mode<synchronous>, transform_indices = @transform_12, window_bounds = array<i64: 1, 6>}, {transform_indices = @transform_13, window_bounds = array<i64: 1, 1, 6>}]} {
    %c0 = arith.constant 0 : index
    %c0_0 = arith.constant 0 : index
    %c0_1 = arith.constant 0 : index
    %0 = vector.load %arg1[%c0, %c0_0, %c0_1] : memref<1x16x4xf32, #tpu.memory_space<vmem>>, vector<1x16x4xf32>
    %1 = vector.shape_cast %0 : vector<1x16x4xf32> to vector<16x4xf32>
    %2 = tpu.iota {dimensions = array<i32: 0>} : vector<16x1xi32>
    %c1_i32 = arith.constant 1 : i32
    %3 = vector.broadcast %c1_i32 : i32 to vector<16x1xi32>
    %4 = arith.cmpi sge, %2, %3 : vector<16x1xi32>
    %c2_i32 = arith.constant 2 : i32
    %5 = vector.broadcast %c2_i32 : i32 to vector<16x1xi32>
    %6 = arith.cmpi sge, %2, %5 : vector<16x1xi32>
    %cst = arith.constant 0.000000e+00 : f32
    %7 = vector.broadcast %cst : f32 to vector<16x8xf32>
    %c0_2 = arith.constant 0 : index
    %c0_3 = arith.constant 0 : index
    %8 = vector.load %arg3[%c0_2, %c0_3] : memref<1x8xf32, #tpu.memory_space<vmem>>, vector<1x8xf32>
    %9 = vector.broadcast %8 : vector<1x8xf32> to vector<16x8xf32>
    %10 = arith.addf %7, %9 : vector<16x8xf32>
    %c1_i32_4 = arith.constant 1 : i32
    %11 = tpu.dynamic_rotate %1 by %c1_i32_4 dim 0 : vector<16x4xf32>, i32 -> vector<16x4xf32>
    %cst_5 = arith.constant 0.000000e+00 : f32
    %12 = vector.shape_cast %4 : vector<16x1xi1> to vector<16x1xi1>
    %13 = vector.broadcast %12 : vector<16x1xi1> to vector<16x4xi1>
    %14 = vector.broadcast %cst_5 : f32 to vector<16x4xf32>
    %15 = arith.select %13, %11, %14 : vector<16x4xi1>, vector<16x4xf32>
    %c0_6 = arith.constant 0 : index
    %c0_7 = arith.constant 0 : index
    %c0_8 = arith.constant 0 : index
    %16 = vector.load %arg2[%c0_6, %c0_7, %c0_8] : memref<2x4x8xf32, #tpu.memory_space<vmem>>, vector<1x4x8xf32>
    %17 = vector.shape_cast %16 : vector<1x4x8xf32> to vector<4x8xf32>
    %cst_9 = arith.constant dense<0.000000e+00> : vector<16x8xf32>
    %18 = tpu.matmul %15, %17, %cst_9 {dimension_numbers = #tpu.dot_dimension_numbers<[1], [0], [0], [1], [0, 0, 1, 1], [], []>} : vector<16x4xf32>, vector<4x8xf32>, vector<16x8xf32> -> vector<16x8xf32>
    %19 = arith.addf %10, %18 : vector<16x8xf32>
    %c1 = arith.constant 1 : index
    %c0_10 = arith.constant 0 : index
    %c0_11 = arith.constant 0 : index
    %20 = vector.load %arg2[%c1, %c0_10, %c0_11] : memref<2x4x8xf32, #tpu.memory_space<vmem>>, vector<1x4x8xf32>
    %21 = vector.shape_cast %20 : vector<1x4x8xf32> to vector<4x8xf32>
    %cst_12 = arith.constant dense<0.000000e+00> : vector<16x8xf32>
    %22 = tpu.matmul %1, %21, %cst_12 {dimension_numbers = #tpu.dot_dimension_numbers<[1], [0], [0], [1], [0, 0, 1, 1], [], []>} : vector<16x4xf32>, vector<4x8xf32>, vector<16x8xf32> -> vector<16x8xf32>
    %23 = arith.addf %19, %22 : vector<16x8xf32>
    %cst_13 = arith.constant 0.000000e+00 : f32
    %24 = vector.broadcast %cst_13 : f32 to vector<16x8xf32>
    %25 = arith.maximumf %23, %24 : vector<16x8xf32>
    %cst_14 = arith.constant 0.000000e+00 : f32
    %26 = vector.broadcast %cst_14 : f32 to vector<16x8xf32>
    %c0_15 = arith.constant 0 : index
    %c0_16 = arith.constant 0 : index
    %27 = vector.load %arg5[%c0_15, %c0_16] : memref<1x8xf32, #tpu.memory_space<vmem>>, vector<1x8xf32>
    %28 = vector.broadcast %27 : vector<1x8xf32> to vector<16x8xf32>
    %29 = arith.addf %26, %28 : vector<16x8xf32>
    %c1_i32_17 = arith.constant 1 : i32
    %30 = tpu.dynamic_rotate %25 by %c1_i32_17 dim 0 : vector<16x8xf32>, i32 -> vector<16x8xf32>
    %cst_18 = arith.constant 0.000000e+00 : f32
    %31 = vector.shape_cast %4 : vector<16x1xi1> to vector<16x1xi1>
    %32 = vector.broadcast %31 : vector<16x1xi1> to vector<16x8xi1>
    %33 = vector.broadcast %cst_18 : f32 to vector<16x8xf32>
    %34 = arith.select %32, %30, %33 : vector<16x8xi1>, vector<16x8xf32>
    %c0_19 = arith.constant 0 : index
    %c0_20 = arith.constant 0 : index
    %c0_21 = arith.constant 0 : index
    %35 = vector.load %arg4[%c0_19, %c0_20, %c0_21] : memref<2x8x8xf32, #tpu.memory_space<vmem>>, vector<1x8x8xf32>
    %36 = vector.shape_cast %35 : vector<1x8x8xf32> to vector<8x8xf32>
    %cst_22 = arith.constant dense<0.000000e+00> : vector<16x8xf32>
    %37 = tpu.matmul %34, %36, %cst_22 {dimension_numbers = #tpu.dot_dimension_numbers<[1], [0], [0], [1], [0, 0, 1, 1], [], []>} : vector<16x8xf32>, vector<8x8xf32>, vector<16x8xf32> -> vector<16x8xf32>
    %38 = arith.addf %29, %37 : vector<16x8xf32>
    %c1_23 = arith.constant 1 : index
    %c0_24 = arith.constant 0 : index
    %c0_25 = arith.constant 0 : index
    %39 = vector.load %arg4[%c1_23, %c0_24, %c0_25] : memref<2x8x8xf32, #tpu.memory_space<vmem>>, vector<1x8x8xf32>
    %40 = vector.shape_cast %39 : vector<1x8x8xf32> to vector<8x8xf32>
    %cst_26 = arith.constant dense<0.000000e+00> : vector<16x8xf32>
    %41 = tpu.matmul %25, %40, %cst_26 {dimension_numbers = #tpu.dot_dimension_numbers<[1], [0], [0], [1], [0, 0, 1, 1], [], []>} : vector<16x8xf32>, vector<8x8xf32>, vector<16x8xf32> -> vector<16x8xf32>
    %42 = arith.addf %38, %41 : vector<16x8xf32>
    %cst_27 = arith.constant 0.000000e+00 : f32
    %43 = vector.broadcast %cst_27 : f32 to vector<16x8xf32>
    %44 = arith.maximumf %42, %43 : vector<16x8xf32>
    %c0_28 = arith.constant 0 : index
    %c0_29 = arith.constant 0 : index
    %45 = vector.load %arg6[%c0_28, %c0_29] : memref<4x8xf32, #tpu.memory_space<vmem>>, vector<4x8xf32>
    %cst_30 = arith.constant dense<0.000000e+00> : vector<16x8xf32>
    %46 = tpu.matmul %1, %45, %cst_30 {dimension_numbers = #tpu.dot_dimension_numbers<[1], [0], [0], [1], [0, 0, 1, 1], [], []>} : vector<16x4xf32>, vector<4x8xf32>, vector<16x8xf32> -> vector<16x8xf32>
    %c0_31 = arith.constant 0 : index
    %c0_32 = arith.constant 0 : index
    %47 = vector.load %arg7[%c0_31, %c0_32] : memref<1x8xf32, #tpu.memory_space<vmem>>, vector<1x8xf32>
    %48 = vector.broadcast %47 : vector<1x8xf32> to vector<16x8xf32>
    %49 = arith.addf %46, %48 : vector<16x8xf32>
    %50 = arith.addf %44, %49 : vector<16x8xf32>
    %cst_33 = arith.constant 0.000000e+00 : f32
    %51 = vector.broadcast %cst_33 : f32 to vector<16x8xf32>
    %52 = arith.maximumf %50, %51 : vector<16x8xf32>
    %cst_34 = arith.constant 0.000000e+00 : f32
    %53 = vector.broadcast %cst_34 : f32 to vector<16x8xf32>
    %c0_35 = arith.constant 0 : index
    %c0_36 = arith.constant 0 : index
    %54 = vector.load %arg9[%c0_35, %c0_36] : memref<1x8xf32, #tpu.memory_space<vmem>>, vector<1x8xf32>
    %55 = vector.broadcast %54 : vector<1x8xf32> to vector<16x8xf32>
    %56 = arith.addf %53, %55 : vector<16x8xf32>
    %c2_i32_37 = arith.constant 2 : i32
    %57 = tpu.dynamic_rotate %52 by %c2_i32_37 dim 0 : vector<16x8xf32>, i32 -> vector<16x8xf32>
    %cst_38 = arith.constant 0.000000e+00 : f32
    %58 = vector.shape_cast %6 : vector<16x1xi1> to vector<16x1xi1>
    %59 = vector.broadcast %58 : vector<16x1xi1> to vector<16x8xi1>
    %60 = vector.broadcast %cst_38 : f32 to vector<16x8xf32>
    %61 = arith.select %59, %57, %60 : vector<16x8xi1>, vector<16x8xf32>
    %c0_39 = arith.constant 0 : index
    %c0_40 = arith.constant 0 : index
    %c0_41 = arith.constant 0 : index
    %62 = vector.load %arg8[%c0_39, %c0_40, %c0_41] : memref<2x8x8xf32, #tpu.memory_space<vmem>>, vector<1x8x8xf32>
    %63 = vector.shape_cast %62 : vector<1x8x8xf32> to vector<8x8xf32>
    %cst_42 = arith.constant dense<0.000000e+00> : vector<16x8xf32>
    %64 = tpu.matmul %61, %63, %cst_42 {dimension_numbers = #tpu.dot_dimension_numbers<[1], [0], [0], [1], [0, 0, 1, 1], [], []>} : vector<16x8xf32>, vector<8x8xf32>, vector<16x8xf32> -> vector<16x8xf32>
    %65 = arith.addf %56, %64 : vector<16x8xf32>
    %c1_43 = arith.constant 1 : index
    %c0_44 = arith.constant 0 : index
    %c0_45 = arith.constant 0 : index
    %66 = vector.load %arg8[%c1_43, %c0_44, %c0_45] : memref<2x8x8xf32, #tpu.memory_space<vmem>>, vector<1x8x8xf32>
    %67 = vector.shape_cast %66 : vector<1x8x8xf32> to vector<8x8xf32>
    %cst_46 = arith.constant dense<0.000000e+00> : vector<16x8xf32>
    %68 = tpu.matmul %52, %67, %cst_46 {dimension_numbers = #tpu.dot_dimension_numbers<[1], [0], [0], [1], [0, 0, 1, 1], [], []>} : vector<16x8xf32>, vector<8x8xf32>, vector<16x8xf32> -> vector<16x8xf32>
    %69 = arith.addf %65, %68 : vector<16x8xf32>
    %cst_47 = arith.constant 0.000000e+00 : f32
    %70 = vector.broadcast %cst_47 : f32 to vector<16x8xf32>
    %71 = arith.maximumf %69, %70 : vector<16x8xf32>
    %cst_48 = arith.constant 0.000000e+00 : f32
    %72 = vector.broadcast %cst_48 : f32 to vector<16x8xf32>
    %c0_49 = arith.constant 0 : index
    %c0_50 = arith.constant 0 : index
    %73 = vector.load %arg11[%c0_49, %c0_50] : memref<1x8xf32, #tpu.memory_space<vmem>>, vector<1x8xf32>
    %74 = vector.broadcast %73 : vector<1x8xf32> to vector<16x8xf32>
    %75 = arith.addf %72, %74 : vector<16x8xf32>
    %c2_i32_51 = arith.constant 2 : i32
    %76 = tpu.dynamic_rotate %71 by %c2_i32_51 dim 0 : vector<16x8xf32>, i32 -> vector<16x8xf32>
    %cst_52 = arith.constant 0.000000e+00 : f32
    %77 = vector.shape_cast %6 : vector<16x1xi1> to vector<16x1xi1>
    %78 = vector.broadcast %77 : vector<16x1xi1> to vector<16x8xi1>
    %79 = vector.broadcast %cst_52 : f32 to vector<16x8xf32>
    %80 = arith.select %78, %76, %79 : vector<16x8xi1>, vector<16x8xf32>
    %c0_53 = arith.constant 0 : index
    %c0_54 = arith.constant 0 : index
    %c0_55 = arith.constant 0 : index
    %81 = vector.load %arg10[%c0_53, %c0_54, %c0_55] : memref<2x8x8xf32, #tpu.memory_space<vmem>>, vector<1x8x8xf32>
    %82 = vector.shape_cast %81 : vector<1x8x8xf32> to vector<8x8xf32>
    %cst_56 = arith.constant dense<0.000000e+00> : vector<16x8xf32>
    %83 = tpu.matmul %80, %82, %cst_56 {dimension_numbers = #tpu.dot_dimension_numbers<[1], [0], [0], [1], [0, 0, 1, 1], [], []>} : vector<16x8xf32>, vector<8x8xf32>, vector<16x8xf32> -> vector<16x8xf32>
    %84 = arith.addf %75, %83 : vector<16x8xf32>
    %c1_57 = arith.constant 1 : index
    %c0_58 = arith.constant 0 : index
    %c0_59 = arith.constant 0 : index
    %85 = vector.load %arg10[%c1_57, %c0_58, %c0_59] : memref<2x8x8xf32, #tpu.memory_space<vmem>>, vector<1x8x8xf32>
    %86 = vector.shape_cast %85 : vector<1x8x8xf32> to vector<8x8xf32>
    %cst_60 = arith.constant dense<0.000000e+00> : vector<16x8xf32>
    %87 = tpu.matmul %71, %86, %cst_60 {dimension_numbers = #tpu.dot_dimension_numbers<[1], [0], [0], [1], [0, 0, 1, 1], [], []>} : vector<16x8xf32>, vector<8x8xf32>, vector<16x8xf32> -> vector<16x8xf32>
    %88 = arith.addf %84, %87 : vector<16x8xf32>
    %cst_61 = arith.constant 0.000000e+00 : f32
    %89 = vector.broadcast %cst_61 : f32 to vector<16x8xf32>
    %90 = arith.maximumf %88, %89 : vector<16x8xf32>
    %91 = arith.addf %90, %52 : vector<16x8xf32>
    %cst_62 = arith.constant 0.000000e+00 : f32
    %92 = vector.broadcast %cst_62 : f32 to vector<16x8xf32>
    %93 = arith.maximumf %91, %92 : vector<16x8xf32>
    %94 = vector.extract_strided_slice %93 {offsets = [15, 0], sizes = [1, 8], strides = [1, 1]} : vector<16x8xf32> to vector<1x8xf32>
    %c0_63 = arith.constant 0 : index
    %c0_64 = arith.constant 0 : index
    %95 = vector.load %arg12[%c0_63, %c0_64] : memref<8x6xf32, #tpu.memory_space<vmem>>, vector<8x6xf32>
    %cst_65 = arith.constant dense<0.000000e+00> : vector<1x6xf32>
    %96 = tpu.matmul %94, %95, %cst_65 {dimension_numbers = #tpu.dot_dimension_numbers<[1], [0], [0], [1], [0, 0, 1, 1], [], []>} : vector<1x8xf32>, vector<8x6xf32>, vector<1x6xf32> -> vector<1x6xf32>
    %c0_66 = arith.constant 0 : index
    %c0_67 = arith.constant 0 : index
    %97 = vector.load %arg13[%c0_66, %c0_67] : memref<1x6xf32, #tpu.memory_space<vmem>>, vector<1x6xf32>
    %98 = arith.addf %96, %97 : vector<1x6xf32>
    %cst_68 = arith.constant dense<0xFF800000> : vector<1xf32>
    %99 = vector.multi_reduction <maximumf>, %98, %cst_68 [1] : vector<1x6xf32> to vector<1xf32>
    %100 = vector.shape_cast %99 : vector<1xf32> to vector<1x1xf32>
    %101 = vector.broadcast %100 : vector<1x1xf32> to vector<1x6xf32>
    %102 = arith.subf %98, %101 : vector<1x6xf32>
    %103 = math.exp %102 : vector<1x6xf32>
    %cst_69 = arith.constant dense<0.000000e+00> : vector<1xf32>
    %104 = vector.multi_reduction <add>, %103, %cst_69 [1] : vector<1x6xf32> to vector<1xf32>
    %105 = vector.shape_cast %104 : vector<1xf32> to vector<1x1xf32>
    %106 = math.log %105 : vector<1x1xf32>
    %107 = vector.broadcast %106 : vector<1x1xf32> to vector<1x6xf32>
    %108 = arith.subf %102, %107 : vector<1x6xf32>
    %109 = vector.shape_cast %108 : vector<1x6xf32> to vector<1x1x6xf32>
    %c0_70 = arith.constant 0 : index
    %c0_71 = arith.constant 0 : index
    %c0_72 = arith.constant 0 : index
    %110 = vector.load %arg14[%c0_70, %c0_71, %c0_72] : memref<1x1x6xf32, #tpu.memory_space<vmem>>, vector<1x1x6xf32>
    tpu.vector_store %arg14[%c0_70, %c0_71, %c0_72], %109 {strides = array<i32>} : memref<1x1x6xf32, #tpu.memory_space<vmem>>, vector<1x1x6xf32>,
    return
  }
  func.func @transform_0(%arg0: i32) -> (i32, i32, i32) {
    %c0_i32 = arith.constant 0 : i32
    %c0_i32_0 = arith.constant 0 : i32
    %c0_i32_1 = arith.constant 0 : i32
    return %arg0, %c0_i32, %c0_i32_0 : i32, i32, i32
  }
  func.func @transform_1(%arg0: i32) -> (i32, i32, i32) {
    %c0_i32 = arith.constant 0 : i32
    %c0_i32_0 = arith.constant 0 : i32
    %c0_i32_1 = arith.constant 0 : i32
    %c0_i32_2 = arith.constant 0 : i32
    return %c0_i32, %c0_i32_0, %c0_i32_1 : i32, i32, i32
  }
  func.func @transform_2(%arg0: i32) -> (i32, i32) {
    %c0_i32 = arith.constant 0 : i32
    %c0_i32_0 = arith.constant 0 : i32
    %c0_i32_1 = arith.constant 0 : i32
    return %c0_i32, %c0_i32_0 : i32, i32
  }
  func.func @transform_3(%arg0: i32) -> (i32, i32, i32) {
    %c0_i32 = arith.constant 0 : i32
    %c0_i32_0 = arith.constant 0 : i32
    %c0_i32_1 = arith.constant 0 : i32
    %c0_i32_2 = arith.constant 0 : i32
    return %c0_i32, %c0_i32_0, %c0_i32_1 : i32, i32, i32
  }
  func.func @transform_4(%arg0: i32) -> (i32, i32) {
    %c0_i32 = arith.constant 0 : i32
    %c0_i32_0 = arith.constant 0 : i32
    %c0_i32_1 = arith.constant 0 : i32
    return %c0_i32, %c0_i32_0 : i32, i32
  }
  func.func @transform_5(%arg0: i32) -> (i32, i32) {
    %c0_i32 = arith.constant 0 : i32
    %c0_i32_0 = arith.constant 0 : i32
    %c0_i32_1 = arith.constant 0 : i32
    return %c0_i32, %c0_i32_0 : i32, i32
  }
  func.func @transform_6(%arg0: i32) -> (i32, i32) {
    %c0_i32 = arith.constant 0 : i32
    %c0_i32_0 = arith.constant 0 : i32
    %c0_i32_1 = arith.constant 0 : i32
    return %c0_i32, %c0_i32_0 : i32, i32
  }
  func.func @transform_7(%arg0: i32) -> (i32, i32, i32) {
    %c0_i32 = arith.constant 0 : i32
    %c0_i32_0 = arith.constant 0 : i32
    %c0_i32_1 = arith.constant 0 : i32
    %c0_i32_2 = arith.constant 0 : i32
    return %c0_i32, %c0_i32_0, %c0_i32_1 : i32, i32, i32
  }
  func.func @transform_8(%arg0: i32) -> (i32, i32) {
    %c0_i32 = arith.constant 0 : i32
    %c0_i32_0 = arith.constant 0 : i32
    %c0_i32_1 = arith.constant 0 : i32
    return %c0_i32, %c0_i32_0 : i32, i32
  }
  func.func @transform_9(%arg0: i32) -> (i32, i32, i32) {
    %c0_i32 = arith.constant 0 : i32
    %c0_i32_0 = arith.constant 0 : i32
    %c0_i32_1 = arith.constant 0 : i32
    %c0_i32_2 = arith.constant 0 : i32
    return %c0_i32, %c0_i32_0, %c0_i32_1 : i32, i32, i32
  }
  func.func @transform_10(%arg0: i32) -> (i32, i32) {
    %c0_i32 = arith.constant 0 : i32
    %c0_i32_0 = arith.constant 0 : i32
    %c0_i32_1 = arith.constant 0 : i32
    return %c0_i32, %c0_i32_0 : i32, i32
  }
  func.func @transform_11(%arg0: i32) -> (i32, i32) {
    %c0_i32 = arith.constant 0 : i32
    %c0_i32_0 = arith.constant 0 : i32
    %c0_i32_1 = arith.constant 0 : i32
    return %c0_i32, %c0_i32_0 : i32, i32
  }
  func.func @transform_12(%arg0: i32) -> (i32, i32) {
    %c0_i32 = arith.constant 0 : i32
    %c0_i32_0 = arith.constant 0 : i32
    %c0_i32_1 = arith.constant 0 : i32
    return %c0_i32, %c0_i32_0 : i32, i32
  }
  func.func @transform_13(%arg0: i32) -> (i32, i32, i32) {
    %c0_i32 = arith.constant 0 : i32
    %c0_i32_0 = arith.constant 0 : i32
    %c0_i32_1 = arith.constant 0 : i32
    return %arg0, %c0_i32, %c0_i32_0 : i32, i32, i32
  }
}

</mosaic_0001>

<llo_original>
// kernel: fwd.1
$region0: #{fwd.1}
  #allocation0 [shape = 'u32[]', space=smem, size = 0x4, offset = 0x4, fixed_abs, tag = 'smem constant byte address 0x4 - core index']
  #allocation1 [shape = 'u32[144,128]{1,0:T(1,128)}', space=vmem, size = 0x12000, scoped, tag = 'internal scratch']
  %s0 = inlined_call_operand.vmem [shape: f32[2,16,4], index: 0, kind: input, shape index: {}]
  %s1 = inlined_call_operand.hbm [shape: f32[2,4,8], index: 1, kind: input, shape index: {}]
  %s2 = inlined_call_operand.hbm [shape: f32[1,8], index: 2, kind: input, shape index: {}]
  %s3 = inlined_call_operand.vmem [shape: f32[2,8,8], index: 3, kind: input, shape index: {}]
  %s4 = inlined_call_operand.hbm [shape: f32[1,8], index: 4, kind: input, shape index: {}]
  %s5 = inlined_call_operand.hbm [shape: f32[4,8], index: 5, kind: input, shape index: {}]
  %s6 = inlined_call_operand.hbm [shape: f32[1,8], index: 6, kind: input, shape index: {}]
  %s7 = inlined_call_operand.vmem [shape: f32[2,8,8], index: 7, kind: input, shape index: {}]
  %s8 = inlined_call_operand.hbm [shape: f32[1,8], index: 8, kind: input, shape index: {}]
  %s9 = inlined_call_operand.vmem [shape: f32[2,8,8], index: 9, kind: input, shape index: {}]
  %s10 = inlined_call_operand.vmem [shape: f32[1,8], index: 10, kind: input, shape index: {}]
  %s11 = inlined_call_operand.vmem [shape: f32[8,6], index: 11, kind: input, shape index: {}]
  %s12 = inlined_call_operand.vmem [shape: f32[1,6], index: 12, kind: input, shape index: {}]
  %s13 = inlined_call_operand.hbm [shape: f32[2,1,6], index: 13, kind: output, shape index: {}]
  %s14 = sld [smem:[#allocation0]]
  $region109: #{fwd.1} parent=0
    _
  %s16 = ssub.s32 1, %s14
  %s17 = scalar_select 0, %s16, %s14
  $region1: #{fwd.1} parent=0
    #allocation2 [shape = 'u8[4096]{0}', space=vmem, size = 0x1000, scoped, tag = 'input window, operand 1, single buffered']
    #allocation3 [shape = 's32[2]{0}', space=sflag, size = 0x8, scoped, tag = 'scoped memory for fwd.1']
    #allocation4 [shape = 's32[2]{0}', space=sflag, size = 0x8, scoped, tag = 'scoped memory for fwd.1']
    #allocation5 [shape = 'u8[512]{0}', space=vmem, size = 0x400, scoped, tag = 'input window, operand 2, single buffered']
    #allocation6 [shape = 's32[1]{0}', space=sflag, size = 0x4, scoped, tag = 'scoped memory for fwd.1']
    #allocation7 [shape = 'u8[512]{0}', space=vmem, size = 0x400, scoped, tag = 'input window, operand 4, single buffered']
    #allocation8 [shape = 'u8[2048]{0}', space=vmem, size = 0x800, scoped, tag = 'input window, operand 5, single buffered']
    #allocation9 [shape = 's32[1]{0}', space=sflag, size = 0x4, scoped, tag = 'scoped memory for fwd.1']
    #allocation10 [shape = 'u8[512]{0}', space=vmem, size = 0x400, scoped, tag = 'input window, operand 6, single buffered']
    #allocation11 [shape = 'u8[512]{0}', space=vmem, size = 0x400, scoped, tag = 'input window, operand 8, single buffered']
    #allocation12 [shape = 's32[1]{0}', space=sflag, size = 0x4, scoped, tag = 'scoped memory for fwd.1']
    #allocation13 [shape = 'u8[1024]{0}', space=vmem, size = 0x400, scoped, tag = 'output window, operand 0']
    %18 = vsyncpa [#allocation3], 0
    %19 = vsyncpa [#allocation6], 0
    %20 = vsyncpa [#allocation9], 0
    %21 = vsyncpa [#allocation12], 0
    %22 = vsyncpa [#allocation4], 0
    %s23 = scalar_lea.sflag [#allocation4], 1
    %24 = vsyncpa %s23, 0
    loop: start=0, step=1, limit=4
    $region2: #{fwd.1} parent=1 // loop_pre_header
      _
    $region3: #{fwd.1} parent=1 // loop_header
      %s26 = sphi 0, %s30
      %p27 = scmp.ge.s32.totalorder %s26, 4
      %s36 = sphi 0, %s38
      %s39 = sphi 0, %s36
      %s40 = sphi 0, %s39
      %s56 = sphi 0, %s40
      %s60 = sphi 0, %s60
      %s62 = sphi 0, %s60
      %s63 = sphi 0, %s62
      %s77 = sphi 0, %s63
      %s81 = sphi 0, %s81
      %s83 = sphi 0, %s81
      %s84 = sphi 0, %s83
      %s98 = sphi 0, %s84
      %s102 = sphi 0, %s102
      %s104 = sphi 0, %s102
      %s105 = sphi 0, %s104
      %s119 = sphi 0, %s105
      %s123 = sphi 0, %s123
      %s125 = sphi 0, %s123
      %s126 = sphi 0, %s125
      %s140 = sphi 0, %s126
      %s144 = sphi 0, %s144
      %s146 = sphi 0, %s144
      %s147 = sphi 0, %s146
      %s161 = sphi 0, %s147
      %s165 = sphi 0, %s165
      %s167 = sphi 0, %s165
      %s168 = sphi 0, %s167
      %s182 = sphi 0, %s168
      %s186 = sphi 0, %s186
      %s188 = sphi 0, %s186
      %s189 = sphi 0, %s188
      %s203 = sphi 0, %s189
      %s207 = sphi 0, %s207
      %s209 = sphi 0, %s207
      %s210 = sphi 0, %s209
      %s224 = sphi 0, %s210
      %s228 = sphi 0, %s228
      %s230 = sphi 0, %s228
      %s231 = sphi 0, %s230
      %s245 = sphi 0, %s231
      %s249 = sphi 0, %s249
      %s251 = sphi 0, %s249
      %s252 = sphi 0, %s251
      %s266 = sphi 0, %s252
      %s270 = sphi 0, %s270
      %s272 = sphi 0, %s270
      %s273 = sphi 0, %s272
      %s287 = sphi 0, %s273
      %s291 = sphi 0, %s291
      %s293 = sphi 0, %s291
      %s294 = sphi 0, %s293
      %s308 = sphi 0, %s294
      %s314 = sphi 0, %s316
      %s317 = sphi 0, %s314
      %s318 = sphi 0, %s317
      %s334 = sphi 0, %s318
    $region4: #{fwd.1} parent=1 // loop_header_branch
      %29 = sbr.rel (%p27) target = $region8
    $region5: #{fwd.1} parent=1 // loop_body
      %s31 = ssub.s32 %s26, 1
      %s32 = ssub.s32 %s26, 2
      %s33 = sadd.s32 %s26, 1
      %s34 = ssub.s32 %s26, %s33
      %p35 = scmp.eq.s32.totalorder %s34, 0
      %s37 = sadd.s32 %s36, 1
      %s38 = scalar_select %p35, %s36, %s37
      %p41 = pneg %p35
      %p42 = scmp.eq.s32.totalorder %s26, 1
      %p43 = por %p41, %p42
      %p44 = scmp.ne.s32.totalorder %s36, %s39
      %p45 = scmp.eq.s32.totalorder %s26, 0
      %p46 = por %p44, %p45
      %p47 = scmp.ne.s32.totalorder %s36, %s39
      %p48 = scmp.eq.s32.totalorder %s31, 1
      %p49 = por %p47, %p48
      %p50 = scmp.ne.s32.totalorder %s39, %s40
      %p51 = scmp.eq.s32.totalorder %s31, 0
      %p52 = por %p50, %p51
      %p53 = scmp.ne.s32.totalorder %s39, %s40
      %p54 = scmp.eq.s32.totalorder %s32, 1
      %p55 = por %p53, %p54
      %p57 = scmp.ne.s32.totalorder %s40, %s56
      %p58 = scmp.eq.s32.totalorder %s32, 0
      %p59 = por %p57, %p58
      %s61 = sadd.s32 %s60, 1
      %p64 = scmp.eq.s32.totalorder %s26, 1
      %p65 = scmp.ne.s32.totalorder %s60, %s62
      %p66 = scmp.eq.s32.totalorder %s26, 0
      %p67 = por %p65, %p66
      %p68 = scmp.ne.s32.totalorder %s60, %s62
      %p69 = scmp.eq.s32.totalorder %s31, 1
      %p70 = por %p68, %p69
      %p71 = scmp.ne.s32.totalorder %s62, %s63
      %p72 = scmp.eq.s32.totalorder %s31, 0
      %p73 = por %p71, %p72
      %p74 = scmp.ne.s32.totalorder %s62, %s63
      %p75 = scmp.eq.s32.totalorder %s32, 1
      %p76 = por %p74, %p75
      %p78 = scmp.ne.s32.totalorder %s63, %s77
      %p79 = scmp.eq.s32.totalorder %s32, 0
      %p80 = por %p78, %p79
      %s82 = sadd.s32 %s81, 1
      %p85 = scmp.eq.s32.totalorder %s26, 1
      %p86 = scmp.ne.s32.totalorder %s81, %s83
      %p87 = scmp.eq.s32.totalorder %s26, 0
      %p88 = por %p86, %p87
      %p89 = scmp.ne.s32.totalorder %s81, %s83
      %p90 = scmp.eq.s32.totalorder %s31, 1
      %p91 = por %p89, %p90
      %p92 = scmp.ne.s32.totalorder %s83, %s84
      %p93 = scmp.eq.s32.totalorder %s31, 0
      %p94 = por %p92, %p93
      %p95 = scmp.ne.s32.totalorder %s83, %s84
      %p96 = scmp.eq.s32.totalorder %s32, 1
      %p97 = por %p95, %p96
      %p99 = scmp.ne.s32.totalorder %s84, %s98
      %p100 = scmp.eq.s32.totalorder %s32, 0
      %p101 = por %p99, %p100
      %s103 = sadd.s32 %s102, 1
      %p106 = scmp.eq.s32.totalorder %s26, 1
      %p107 = scmp.ne.s32.totalorder %s102, %s104
      %p108 = scmp.eq.s32.totalorder %s26, 0
      %p109 = por %p107, %p108
      %p110 = scmp.ne.s32.totalorder %s102, %s104
      %p111 = scmp.eq.s32.totalorder %s31, 1
      %p112 = por %p110, %p111
      %p113 = scmp.ne.s32.totalorder %s104, %s105
      %p114 = scmp.eq.s32.totalorder %s31, 0
      %p115 = por %p113, %p114
      %p116 = scmp.ne.s32.totalorder %s104, %s105
      %p117 = scmp.eq.s32.totalorder %s32, 1
      %p118 = por %p116, %p117
      %p120 = scmp.ne.s32.totalorder %s105, %s119
      %p121 = scmp.eq.s32.totalorder %s32, 0
      %p122 = por %p120, %p121
      %s124 = sadd.s32 %s123, 1
      %p127 = scmp.eq.s32.totalorder %s26, 1
      %p128 = scmp.ne.s32.totalorder %s123, %s125
      %p129 = scmp.eq.s32.totalorder %s26, 0
      %p130 = por %p128, %p129
      %p131 = scmp.ne.s32.totalorder %s123, %s125
      %p132 = scmp.eq.s32.totalorder %s31, 1
      %p133 = por %p131, %p132
      %p134 = scmp.ne.s32.totalorder %s125, %s126
      %p135 = scmp.eq.s32.totalorder %s31, 0
      %p136 = por %p134, %p135
      %p137 = scmp.ne.s32.totalorder %s125, %s126
      %p138 = scmp.eq.s32.totalorder %s32, 1
      %p139 = por %p137, %p138
      %p141 = scmp.ne.s32.totalorder %s126, %s140
      %p142 = scmp.eq.s32.totalorder %s32, 0
      %p143 = por %p141, %p142
      %s145 = sadd.s32 %s144, 1
      %p148 = scmp.eq.s32.totalorder %s26, 1
      %p149 = scmp.ne.s32.totalorder %s144, %s146
      %p150 = scmp.eq.s32.totalorder %s26, 0
      %p151 = por %p149, %p150
      %p152 = scmp.ne.s32.totalorder %s144, %s146
      %p153 = scmp.eq.s32.totalorder %s31, 1
      %p154 = por %p152, %p153
      %p155 = scmp.ne.s32.totalorder %s146, %s147
      %p156 = scmp.eq.s32.totalorder %s31, 0
      %p157 = por %p155, %p156
      %p158 = scmp.ne.s32.totalorder %s146, %s147
      %p159 = scmp.eq.s32.totalorder %s32, 1
      %p160 = por %p158, %p159
      %p162 = scmp.ne.s32.totalorder %s147, %s161
      %p163 = scmp.eq.s32.totalorder %s32, 0
      %p164 = por %p162, %p163
      %s166 = sadd.s32 %s165, 1
      %p169 = scmp.eq.s32.totalorder %s26, 1
      %p170 = scmp.ne.s32.totalorder %s165, %s167
      %p171 = scmp.eq.s32.totalorder %s26, 0
      %p172 = por %p170, %p171
      %p173 = scmp.ne.s32.totalorder %s165, %s167
      %p174 = scmp.eq.s32.totalorder %s31, 1
      %p175 = por %p173, %p174
      %p176 = scmp.ne.s32.totalorder %s167, %s168
      %p177 = scmp.eq.s32.totalorder %s31, 0
      %p178 = por %p176, %p177
      %p179 = scmp.ne.s32.totalorder %s167, %s168
      %p180 = scmp.eq.s32.totalorder %s32, 1
      %p181 = por %p179, %p180
      %p183 = scmp.ne.s32.totalorder %s168, %s182
      %p184 = scmp.eq.s32.totalorder %s32, 0
      %p185 = por %p183, %p184
      %s187 = sadd.s32 %s186, 1
      %p190 = scmp.eq.s32.totalorder %s26, 1
      %p191 = scmp.ne.s32.totalorder %s186, %s188
      %p192 = scmp.eq.s32.totalorder %s26, 0
      %p193 = por %p191, %p192
      %p194 = scmp.ne.s32.totalorder %s186, %s188
      %p195 = scmp.eq.s32.totalorder %s31, 1
      %p196 = por %p194, %p195
      %p197 = scmp.ne.s32.totalorder %s188, %s189
      %p198 = scmp.eq.s32.totalorder %s31, 0
      %p199 = por %p197, %p198
      %p200 = scmp.ne.s32.totalorder %s188, %s189
      %p201 = scmp.eq.s32.totalorder %s32, 1
      %p202 = por %p200, %p201
      %p204 = scmp.ne.s32.totalorder %s189, %s203
      %p205 = scmp.eq.s32.totalorder %s32, 0
      %p206 = por %p204, %p205
      %s208 = sadd.s32 %s207, 1
      %p211 = scmp.eq.s32.totalorder %s26, 1
      %p212 = scmp.ne.s32.totalorder %s207, %s209
      %p213 = scmp.eq.s32.totalorder %s26, 0
      %p214 = por %p212, %p213
      %p215 = scmp.ne.s32.totalorder %s207, %s209
      %p216 = scmp.eq.s32.totalorder %s31, 1
      %p217 = por %p215, %p216
      %p218 = scmp.ne.s32.totalorder %s209, %s210
      %p219 = scmp.eq.s32.totalorder %s31, 0
      %p220 = por %p218, %p219
      %p221 = scmp.ne.s32.totalorder %s209, %s210
      %p222 = scmp.eq.s32.totalorder %s32, 1
      %p223 = por %p221, %p222
      %p225 = scmp.ne.s32.totalorder %s210, %s224
      %p226 = scmp.eq.s32.totalorder %s32, 0
      %p227 = por %p225, %p226
      %s229 = sadd.s32 %s228, 1
      %p232 = scmp.eq.s32.totalorder %s26, 1
      %p233 = scmp.ne.s32.totalorder %s228, %s230
      %p234 = scmp.eq.s32.totalorder %s26, 0
      %p235 = por %p233, %p234
      %p236 = scmp.ne.s32.totalorder %s228, %s230
      %p237 = scmp.eq.s32.totalorder %s31, 1
      %p238 = por %p236, %p237
      %p239 = scmp.ne.s32.totalorder %s230, %s231
      %p240 = scmp.eq.s32.totalorder %s31, 0
      %p241 = por %p239, %p240
      %p242 = scmp.ne.s32.totalorder %s230, %s231
      %p243 = scmp.eq.s32.totalorder %s32, 1
      %p244 = por %p242, %p243
      %p246 = scmp.ne.s32.totalorder %s231, %s245
      %p247 = scmp.eq.s32.totalorder %s32, 0
      %p248 = por %p246, %p247
      %s250 = sadd.s32 %s249, 1
      %p253 = scmp.eq.s32.totalorder %s26, 1
      %p254 = scmp.ne.s32.totalorder %s249, %s251
      %p255 = scmp.eq.s32.totalorder %s26, 0
      %p256 = por %p254, %p255
      %p257 = scmp.ne.s32.totalorder %s249, %s251
      %p258 = scmp.eq.s32.totalorder %s31, 1
      %p259 = por %p257, %p258
      %p260 = scmp.ne.s32.totalorder %s251, %s252
      %p261 = scmp.eq.s32.totalorder %s31, 0
      %p262 = por %p260, %p261
      %p263 = scmp.ne.s32.totalorder %s251, %s252
      %p264 = scmp.eq.s32.totalorder %s32, 1
      %p265 = por %p263, %p264
      %p267 = scmp.ne.s32.totalorder %s252, %s266
      %p268 = scmp.eq.s32.totalorder %s32, 0
      %p269 = por %p267, %p268
      %s271 = sadd.s32 %s270, 1
      %p274 = scmp.eq.s32.totalorder %s26, 1
      %p275 = scmp.ne.s32.totalorder %s270, %s272
      %p276 = scmp.eq.s32.totalorder %s26, 0
      %p277 = por %p275, %p276
      %p278 = scmp.ne.s32.totalorder %s270, %s272
      %p279 = scmp.eq.s32.totalorder %s31, 1
      %p280 = por %p278, %p279
      %p281 = scmp.ne.s32.totalorder %s272, %s273
      %p282 = scmp.eq.s32.totalorder %s31, 0
      %p283 = por %p281, %p282
      %p284 = scmp.ne.s32.totalorder %s272, %s273
      %p285 = scmp.eq.s32.totalorder %s32, 1
      %p286 = por %p284, %p285
      %p288 = scmp.ne.s32.totalorder %s273, %s287
      %p289 = scmp.eq.s32.totalorder %s32, 0
      %p290 = por %p288, %p289
      %s292 = sadd.s32 %s291, 1
      %p295 = scmp.eq.s32.totalorder %s26, 1
      %p296 = scmp.ne.s32.totalorder %s291, %s293
      %p297 = scmp.eq.s32.totalorder %s26, 0
      %p298 = por %p296, %p297
      %p299 = scmp.ne.s32.totalorder %s291, %s293
      %p300 = scmp.eq.s32.totalorder %s31, 1
      %p301 = por %p299, %p300
      %p302 = scmp.ne.s32.totalorder %s293, %s294
      %p303 = scmp.eq.s32.totalorder %s31, 0
      %p304 = por %p302, %p303
      %p305 = scmp.ne.s32.totalorder %s293, %s294
      %p306 = scmp.eq.s32.totalorder %s32, 1
      %p307 = por %p305, %p306
      %p309 = scmp.ne.s32.totalorder %s294, %s308
      %p310 = scmp.eq.s32.totalorder %s32, 0
      %p311 = por %p309, %p310
      %s312 = ssub.s32 %s26, %s33
      %p313 = scmp.eq.s32.totalorder %s312, 0
      %s315 = sadd.s32 %s314, 1
      %s316 = scalar_select %p313, %s314, %s315
      %p319 = pneg %p313
      %p320 = scmp.eq.s32.totalorder %s26, 1
      %p321 = por %p319, %p320
      %p322 = scmp.ne.s32.totalorder %s314, %s317
      %p323 = scmp.eq.s32.totalorder %s26, 0
      %p324 = por %p322, %p323
      %p325 = scmp.ne.s32.totalorder %s314, %s317
      %p326 = scmp.eq.s32.totalorder %s31, 1
      %p327 = por %p325, %p326
      %p328 = scmp.ne.s32.totalorder %s317, %s318
      %p329 = scmp.eq.s32.totalorder %s31, 0
      %p330 = por %p328, %p329
      %p331 = scmp.ne.s32.totalorder %s317, %s318
      %p332 = scmp.eq.s32.totalorder %s32, 1
      %p333 = por %p331, %p332
      %p335 = scmp.ne.s32.totalorder %s318, %s334
      %p336 = scmp.eq.s32.totalorder %s32, 0
      %p337 = por %p335, %p336
      %p338 = scmp.le.s32.totalorder 1, %s26
      %p339 = scmp.lt.s32.totalorder %s26, 3
      %p340 = pnand %p338, %p339
      %p341 = pneg %p340
      // Predicated region
      $region9: #{fwd.1} parent=5 // pred_check
        _
      $region10: #{fwd.1} parent=5 // pred_check_branch
        %343 = sbr.rel (%p340) target = $region12
      $region11: #{fwd.1} parent=5 // pred_region
        %s344 = ssub.s32 %s26, 1
        // Predicated region
        $region13: #{fwd.1} parent=11 // pred_check
          %p345 = pneg %p73
        $region14: #{fwd.1} parent=11 // pred_check_branch
          %347 = sbr.rel (%p345) target = $region16
        $region15: #{fwd.1} parent=11 // pred_region
          %s349 = ssub.s32 128, 128
          %350 = vsyncadd [#allocation3], %s349
          %s351 = sshll.u32 [#allocation2], 4
          %s352 = int_to_ptr.vmem [resolvable:$true] %s351
          %357 = dma.hbm_to_vmem [thread:$0]  %s1, 128, %s352, [#allocation3], 64, 64, 4
        $region16: #{fwd.1} parent=11 // pred_fallthru
          _
        // Predicated region
        $region17: #{fwd.1} parent=11 // pred_check
          %p358 = pneg %p94
        $region18: #{fwd.1} parent=11 // pred_check_branch
          %360 = sbr.rel (%p358) target = $region20
        $region19: #{fwd.1} parent=11 // pred_region
          %s362 = ssub.s32 16, 16
          %363 = vsyncadd [#allocation6], %s362
          %s365 = sshll.u32 [#allocation5], 4
          %s366 = int_to_ptr.vmem [resolvable:$true] %s365
          %368 = dma.hbm_to_vmem [thread:$0]  %s2, 16, %s366, [#allocation6]
        $region20: #{fwd.1} parent=11 // pred_fallthru
          _
        // Predicated region
        $region21: #{fwd.1} parent=11 // pred_check
          %p369 = pneg %p115
        $region22: #{fwd.1} parent=11 // pred_check_branch
          %371 = sbr.rel (%p369) target = $region24
        $region23: #{fwd.1} parent=11 // pred_region
          _
        $region24: #{fwd.1} parent=11 // pred_fallthru
          _
        // Predicated region
        $region25: #{fwd.1} parent=11 // pred_check
          %p372 = pneg %p136
        $region26: #{fwd.1} parent=11 // pred_check_branch
          %374 = sbr.rel (%p372) target = $region28
        $region27: #{fwd.1} parent=11 // pred_region
          %s376 = ssub.s32 16, 16
          %377 = vsyncadd [#allocation6], %s376
          %s379 = sshll.u32 [#allocation7], 4
          %s380 = int_to_ptr.vmem [resolvable:$true] %s379
          %382 = dma.hbm_to_vmem [thread:$0]  %s4, 16, %s380, [#allocation6]
        $region28: #{fwd.1} parent=11 // pred_fallthru
          _
        // Predicated region
        $region29: #{fwd.1} parent=11 // pred_check
          %p383 = pneg %p157
        $region30: #{fwd.1} parent=11 // pred_check_branch
          %385 = sbr.rel (%p383) target = $region32
        $region31: #{fwd.1} parent=11 // pred_region
          %s387 = ssub.s32 64, 64
          %388 = vsyncadd [#allocation9], %s387
          %s390 = sshll.u32 [#allocation8], 4
          %s391 = int_to_ptr.vmem [resolvable:$true] %s390
          %393 = dma.hbm_to_vmem [thread:$0]  %s5, 64, %s391, [#allocation9]
        $region32: #{fwd.1} parent=11 // pred_fallthru
          _
        // Predicated region
        $region33: #{fwd.1} parent=11 // pred_check
          %p394 = pneg %p178
        $region34: #{fwd.1} parent=11 // pred_check_branch
          %396 = sbr.rel (%p394) target = $region36
        $region35: #{fwd.1} parent=11 // pred_region
          %s398 = ssub.s32 16, 16
          %399 = vsyncadd [#allocation9], %s398
          %s401 = sshll.u32 [#allocation10], 4
          %s402 = int_to_ptr.vmem [resolvable:$true] %s401
          %404 = dma.hbm_to_vmem [thread:$0]  %s6, 16, %s402, [#allocation9]
        $region36: #{fwd.1} parent=11 // pred_fallthru
          _
        // Predicated region
        $region37: #{fwd.1} parent=11 // pred_check
          %p405 = pneg %p199
        $region38: #{fwd.1} parent=11 // pred_check_branch
          %407 = sbr.rel (%p405) target = $region40
        $region39: #{fwd.1} parent=11 // pred_region
          _
        $region40: #{fwd.1} parent=11 // pred_fallthru
          _
        // Predicated region
        $region41: #{fwd.1} parent=11 // pred_check
          %p408 = pneg %p220
        $region42: #{fwd.1} parent=11 // pred_check_branch
          %410 = sbr.rel (%p408) target = $region44
        $region43: #{fwd.1} parent=11 // pred_region
          %s412 = ssub.s32 16, 16
          %413 = vsyncadd [#allocation12], %s412
          %s415 = sshll.u32 [#allocation11], 4
          %s416 = int_to_ptr.vmem [resolvable:$true] %s415
          %418 = dma.hbm_to_vmem [thread:$0]  %s8, 16, %s416, [#allocation12]
        $region44: #{fwd.1} parent=11 // pred_fallthru
          _
        // Predicated region
        $region45: #{fwd.1} parent=11 // pred_check
          %p419 = pneg %p241
        $region46: #{fwd.1} parent=11 // pred_check_branch
          %421 = sbr.rel (%p419) target = $region48
        $region47: #{fwd.1} parent=11 // pred_region
          _
        $region48: #{fwd.1} parent=11 // pred_fallthru
          _
        // Predicated region
        $region49: #{fwd.1} parent=11 // pred_check
          %p422 = pneg %p262
        $region50: #{fwd.1} parent=11 // pred_check_branch
          %424 = sbr.rel (%p422) target = $region52
        $region51: #{fwd.1} parent=11 // pred_region
          _
        $region52: #{fwd.1} parent=11 // pred_fallthru
          _
        // Predicated region
        $region53: #{fwd.1} parent=11 // pred_check
          %p425 = pneg %p283
        $region54: #{fwd.1} parent=11 // pred_check_branch
          %427 = sbr.rel (%p425) target = $region56
        $region55: #{fwd.1} parent=11 // pred_region
          _
        $region56: #{fwd.1} parent=11 // pred_fallthru
          _
        // Predicated region
        $region57: #{fwd.1} parent=11 // pred_check
          %p428 = pneg %p304
        $region58: #{fwd.1} parent=11 // pred_check_branch
          %430 = sbr.rel (%p428) target = $region60
        $region59: #{fwd.1} parent=11 // pred_region
          _
        $region60: #{fwd.1} parent=11 // pred_fallthru
          _
      $region12: #{fwd.1} parent=5 // pred_fallthru
        _
      %p431 = scmp.lt.s32.totalorder %s26, 2
      // Predicated region
      $region61: #{fwd.1} parent=5 // pred_check
        %p432 = pneg %p431
      $region62: #{fwd.1} parent=5 // pred_check_branch
        %434 = sbr.rel (%p432) target = $region64
      $region63: #{fwd.1} parent=5 // pred_region
        // Predicated region
        $region65: #{fwd.1} parent=63 // pred_check
          %p435 = pneg %p46
        $region66: #{fwd.1} parent=63 // pred_check_branch
          %437 = sbr.rel (%p435) target = $region68
        $region67: #{fwd.1} parent=63 // pred_region
          %p438 = scmp.lt.s32.totalorder %s26, 1
          %s439 = scalar_select %p438, %s26, 1
          %s440 = smul.addr %s439, 2
          %s441 = smul.addr %s440, 8
          %s442 = scalar_lea.vmem %s0, %s441
        $region68: #{fwd.1} parent=63 // pred_fallthru
          _
      $region64: #{fwd.1} parent=5 // pred_fallthru
        _
      %p443 = scmp.le.s32.totalorder 1, %s26
      %p444 = scmp.lt.s32.totalorder %s26, 3
      %p445 = pnand %p443, %p444
      %p446 = pneg %p445
      // Predicated region
      $region69: #{fwd.1} parent=5 // pred_check
        _
      $region70: #{fwd.1} parent=5 // pred_check_branch
        %448 = sbr.rel (%p445) target = $region72
      $region71: #{fwd.1} parent=5 // pred_region
        %s449 = ssub.s32 %s26, 1
        // Predicated region
        $region73: #{fwd.1} parent=71 // pred_check
          %p450 = pneg %p73
        $region74: #{fwd.1} parent=71 // pred_check_branch
          %452 = sbr.rel (%p450) target = $region76
        $region75: #{fwd.1} parent=71 // pred_region
          %453 = dma.done [#allocation3], 128
        $region76: #{fwd.1} parent=71 // pred_fallthru
          _
        // Predicated region
        $region77: #{fwd.1} parent=71 // pred_check
          %p454 = pneg %p94
        $region78: #{fwd.1} parent=71 // pred_check_branch
          %456 = sbr.rel (%p454) target = $region80
        $region79: #{fwd.1} parent=71 // pred_region
          %457 = dma.done [#allocation6], 16
        $region80: #{fwd.1} parent=71 // pred_fallthru
          _
        // Predicated region
        $region81: #{fwd.1} parent=71 // pred_check
          %p458 = pneg %p136
        $region82: #{fwd.1} parent=71 // pred_check_branch
          %460 = sbr.rel (%p458) target = $region84
        $region83: #{fwd.1} parent=71 // pred_region
          %461 = dma.done [#allocation6], 16
        $region84: #{fwd.1} parent=71 // pred_fallthru
          _
        // Predicated region
        $region85: #{fwd.1} parent=71 // pred_check
          %p462 = pneg %p157
        $region86: #{fwd.1} parent=71 // pred_check_branch
          %464 = sbr.rel (%p462) target = $region88
        $region87: #{fwd.1} parent=71 // pred_region
          %465 = dma.done [#allocation9], 64
        $region88: #{fwd.1} parent=71 // pred_fallthru
          _
        // Predicated region
        $region89: #{fwd.1} parent=71 // pred_check
          %p466 = pneg %p178
        $region90: #{fwd.1} parent=71 // pred_check_branch
          %468 = sbr.rel (%p466) target = $region92
        $region91: #{fwd.1} parent=71 // pred_region
          %469 = dma.done [#allocation9], 16
        $region92: #{fwd.1} parent=71 // pred_fallthru
          _
        // Predicated region
        $region93: #{fwd.1} parent=71 // pred_check
          %p470 = pneg %p220
        $region94: #{fwd.1} parent=71 // pred_check_branch
          %472 = sbr.rel (%p470) target = $region96
        $region95: #{fwd.1} parent=71 // pred_region
          %473 = dma.done [#allocation12], 16
        $region96: #{fwd.1} parent=71 // pred_fallthru
          _
        %p474 = scmp.lt.s32.totalorder %s31, 1
        %s475 = scalar_select %p474, %s31, 1
        %s476 = smul.addr %s475, 2
        %s477 = smul.addr %s476, 8
        %s478 = scalar_lea.vmem %s0, %s477
        %p479 = pneg %p52
        %p480 = pneg %p49
        %p481 = pneg %p73
        %p482 = pneg %p70
        %p483 = pneg %p94
        %p484 = pneg %p91
        %p485 = pneg %p115
        %p486 = pneg %p112
        %p487 = pneg %p136
        %p488 = pneg %p133
        %p489 = pneg %p157
        %p490 = pneg %p154
        %p491 = pneg %p178
        %p492 = pneg %p175
        %p493 = pneg %p199
        %p494 = pneg %p196
        %p495 = pneg %p220
        %p496 = pneg %p217
        %p497 = pneg %p241
        %p498 = pneg %p238
        %p499 = pneg %p262
        %p500 = pneg %p259
        %p501 = pneg %p283
        %p502 = pneg %p280
        %p503 = pneg %p304
        %p504 = pneg %p301
        %p505 = pneg %p330
        %p506 = pneg %p327
        %s507 = sand.u32 %s317, 1
        %s508 = scalar_lea.sflag [#allocation4], %s507
        %s509 = sand.u32 %s317, 1
        %s510 = scalar_lea.vmem [#allocation13], %s509
        %p511 = scmp.lt.s32.totalorder %s31, 1
        %s512 = scalar_select %p511, %s31, 1
        %s513 = smul.addr %s512, 2
        %s514 = smul.addr %s513, 8
        %s515 = scalar_lea.vmem %s0, %s514
        %v516 = vld [vmem:[%s515] sm:$0xff]
        %v517 = vld [vmem:[%s515 + $0x8] sm:$0xff]
        %v518 = vlaneseq
        %v519 = vshrl.u32 %v518, 7
        %v520 = vadd.s32 %v519, 8
        %vm521 = vcmp.ge.s32.totalorder %v519, 1
        %vm522 = vcmp.ge.s32.totalorder %v520, 1
        %vm523 = vcmp.ge.s32.totalorder %v519, 2
        %vm524 = vcmp.ge.s32.totalorder %v520, 2
        %v525 = vld [vmem:[#allocation5] sm:$0x1]
        %v527 = vlaneseq
        %v528 = vshrl.u32 %v527, 7
        %v529 = vsub.s32 0, %v528
        %v530 = vrot.slane %v525, %v529
        %v532 = vadd.f32 %v530, 0.0
        %v533 = vrot.slane %v516, 7
        %v534 = vrot.slane %v517, 7
        %vm535 = vcmp.lt.s32.totalorder %v519, 1
        %v536 = vsel %vm535, %v533, %v534
        %v537 = vsel %vm535, %v534, %v533
        %v538 = vsel %vm521, 1, 0
        %v539 = vsel %vm522, 1, 0
        %vm540 = vcmp.eq.s32.totalorder %v538, 1
        %vm541 = vcmp.eq.s32.totalorder %v539, 1
        %v542 = vsel %vm540, %v537, 0.0
        %v543 = vsel %vm541, %v536, 0.0
        %v544 = vld [vmem:[#allocation2] sm:$0xf]
        %vm545 = vcmask 31744
        %v547 = vsel %vm545, %v542, 0
        %v550 = vsel %vm545, %v543, 0
        %vm552 = vcmask 1043456
        %v554 = vsel %vm552, %v544, 0
        %556 = vmatprep.subr.mxu0 0.0
        %557 = vmatpush1.msra.mxu0 0.0
        %558 = vmatprep.subr.mxu0 0.0
        %559 = vmatpush1.msra.mxu0 0.0
        %560 = vmatprep.subr.mxu0 0.0
        %561 = vmatpush1.msra.mxu0 0.0
        %562 = vmatprep.subr.mxu0 0.0
        %563 = vmatpush1.msra.mxu0 0.0
        %564 = vmatprep.subr.mxu0 0.0
        %565 = vmatpush1.msra.mxu0 0.0
        %566 = vmatprep.subr.mxu0 0.0
        %567 = vmatpush1.msra.mxu0 0.0
        %568 = vmatprep.subr.mxu0 0.0
        %569 = vmatpush1.msra.mxu0 0.0
        %570 = vmatprep.subr.mxu0 0.0
        %571 = vmatpush1.msra.mxu0 0.0
        %572 = vmatprep.subr.mxu0 0.0
        %573 = vmatpush1.msra.mxu0 0.0
        %574 = vmatprep.subr.mxu0 0.0
        %575 = vmatpush1.msra.mxu0 0.0
        %576 = vmatprep.subr.mxu0 0.0
        %577 = vmatpush1.msra.mxu0 0.0
        %578 = vmatprep.subr.mxu0 0.0
        %579 = vmatpush1.msra.mxu0 0.0
        %580 = vmatprep.subr.mxu0 0.0
        %581 = vmatpush1.msra.mxu0 0.0
        %582 = vmatprep.subr.mxu0 0.0
        %583 = vmatpush1.msra.mxu0 0.0
        %584 = vmatprep.subr.mxu0 0.0
        %585 = vmatpush1.msra.mxu0 0.0
        %586 = vmatprep.subr.mxu0 0.0
        %587 = vmatpush1.msra.mxu0 %v554
        %588 = vmatprep.subr.mxu0 0.0
        %589 = vmatpush2.msra.mxu0 0.0
        %590 = vmatprep.subr.mxu0 0.0
        %591 = vmatpush2.msra.mxu0 0.0
        %592 = vmatprep.subr.mxu0 0.0
        %593 = vmatpush2.msra.mxu0 0.0
        %594 = vmatprep.subr.mxu0 0.0
        %595 = vmatpush2.msra.mxu0 0.0
        %596 = vmatprep.subr.mxu0 0.0
        %597 = vmatpush2.msra.mxu0 0.0
        %598 = vmatprep.subr.mxu0 0.0
        %599 = vmatpush2.msra.mxu0 0.0
        %600 = vmatprep.subr.mxu0 0.0
        %601 = vmatpush2.msra.mxu0 0.0
        %602 = vmatprep.subr.mxu0 0.0
        %603 = vmatpush2.msra.mxu0 0.0
        %604 = vmatprep.subr.mxu0 0.0
        %605 = vmatpush2.msra.mxu0 0.0
        %606 = vmatprep.subr.mxu0 0.0
        %607 = vmatpush2.msra.mxu0 0.0
        %608 = vmatprep.subr.mxu0 0.0
        %609 = vmatpush2.msra.mxu0 0.0
        %610 = vmatprep.subr.mxu0 0.0
        %611 = vmatpush2.msra.mxu0 0.0
        %612 = vmatprep.subr.mxu0 0.0
        %613 = vmatpush2.msra.mxu0 0.0
        %614 = vmatprep.subr.mxu0 0.0
        %615 = vmatpush2.msra.mxu0 0.0
        %616 = vmatprep.subr.mxu0 0.0
        %617 = vmatpush2.msra.mxu0 0.0
        %618 = vmatprep.subr.mxu0 0.0
        %619 = vmatpush2.msra.mxu0 0.0
        %620 = vmatprep.mubr.f32.mxu0 0.0
        %621 = vmatmul.mubr.f32.gmra.mxu0 %v547
        %v622 = vpop.f32.mrf.mxu0
        %v623 = vadd.f32 0.0, %v622
        %v624 = vpop.f32.mrf.mxu0
        %625 = vmatprep.mubr.f32.mxu0 0.0
        %626 = vmatmul.mubr.f32.gmra.mxu0 %v550
        %v627 = vpop.f32.mrf.mxu0
        %v628 = vadd.f32 0.0, %v627
        %v629 = vpop.f32.mrf.mxu0
        %630 = vdwg.mxu0
        %v631 = vadd.f32 %v532, %v623
        %v632 = vadd.f32 %v532, %v628
        %s633 = scalar_lea.vmem [#allocation2], 4
        %v634 = vld [vmem:[%s633] sm:$0xf]
        %v636 = vsel %vm545, %v516, 0
        %v639 = vsel %vm545, %v517, 0
        %v642 = vsel %vm552, %v634, 0
        %644 = vmatprep.subr.mxu0 0.0
        %645 = vmatpush1.msra.mxu0 0.0
        %646 = vmatprep.subr.mxu0 0.0
        %647 = vmatpush1.msra.mxu0 0.0
        %648 = vmatprep.subr.mxu0 0.0
        %649 = vmatpush1.msra.mxu0 0.0
        %650 = vmatprep.subr.mxu0 0.0
        %651 = vmatpush1.msra.mxu0 0.0
        %652 = vmatprep.subr.mxu0 0.0
        %653 = vmatpush1.msra.mxu0 0.0
        %654 = vmatprep.subr.mxu0 0.0
        %655 = vmatpush1.msra.mxu0 0.0
        %656 = vmatprep.subr.mxu0 0.0
        %657 = vmatpush1.msra.mxu0 0.0
        %658 = vmatprep.subr.mxu0 0.0
        %659 = vmatpush1.msra.mxu0 0.0
        %660 = vmatprep.subr.mxu0 0.0
        %661 = vmatpush1.msra.mxu0 0.0
        %662 = vmatprep.subr.mxu0 0.0
        %663 = vmatpush1.msra.mxu0 0.0
        %664 = vmatprep.subr.mxu0 0.0
        %665 = vmatpush1.msra.mxu0 0.0
        %666 = vmatprep.subr.mxu0 0.0
        %667 = vmatpush1.msra.mxu0 0.0
        %668 = vmatprep.subr.mxu0 0.0
        %669 = vmatpush1.msra.mxu0 0.0
        %670 = vmatprep.subr.mxu0 0.0
        %671 = vmatpush1.msra.mxu0 0.0
        %672 = vmatprep.subr.mxu0 0.0
        %673 = vmatpush1.msra.mxu0 0.0
        %674 = vmatprep.subr.mxu0 0.0
        %675 = vmatpush1.msra.mxu0 %v642
        %676 = vmatprep.subr.mxu0 0.0
        %677 = vmatpush2.msra.mxu0 0.0
        %678 = vmatprep.subr.mxu0 0.0
        %679 = vmatpush2.msra.mxu0 0.0
        %680 = vmatprep.subr.mxu0 0.0
        %681 = vmatpush2.msra.mxu0 0.0
        %682 = vmatprep.subr.mxu0 0.0
        %683 = vmatpush2.msra.mxu0 0.0
        %684 = vmatprep.subr.mxu0 0.0
        %685 = vmatpush2.msra.mxu0 0.0
        %686 = vmatprep.subr.mxu0 0.0
        %687 = vmatpush2.msra.mxu0 0.0
        %688 = vmatprep.subr.mxu0 0.0
        %689 = vmatpush2.msra.mxu0 0.0
        %690 = vmatprep.subr.mxu0 0.0
        %691 = vmatpush2.msra.mxu0 0.0
        %692 = vmatprep.subr.mxu0 0.0
        %693 = vmatpush2.msra.mxu0 0.0
        %694 = vmatprep.subr.mxu0 0.0
        %695 = vmatpush2.msra.mxu0 0.0
        %696 = vmatprep.subr.mxu0 0.0
        %697 = vmatpush2.msra.mxu0 0.0
        %698 = vmatprep.subr.mxu0 0.0
        %699 = vmatpush2.msra.mxu0 0.0
        %700 = vmatprep.subr.mxu0 0.0
        %701 = vmatpush2.msra.mxu0 0.0
        %702 = vmatprep.subr.mxu0 0.0
        %703 = vmatpush2.msra.mxu0 0.0
        %704 = vmatprep.subr.mxu0 0.0
        %705 = vmatpush2.msra.mxu0 0.0
        %706 = vmatprep.subr.mxu0 0.0
        %707 = vmatpush2.msra.mxu0 0.0
        %708 = vmatprep.mubr.f32.mxu0 0.0
        %709 = vmatmul.mubr.f32.gmra.mxu0 %v636
        %v710 = vpop.f32.mrf.mxu0
        %v711 = vadd.f32 0.0, %v710
        %v712 = vpop.f32.mrf.mxu0
        %713 = vmatprep.mubr.f32.mxu0 0.0
        %714 = vmatmul.mubr.f32.gmra.mxu0 %v639
        %v715 = vpop.f32.mrf.mxu0
        %v716 = vadd.f32 0.0, %v715
        %v717 = vpop.f32.mrf.mxu0
        %718 = vdwg.mxu0
        %v719 = vadd.f32 %v631, %v711
        %v720 = vadd.f32 %v632, %v716
        %v721 = vmax.f32 %v719, 0.0
        %v722 = vmax.f32 %v720, 0.0
        %v723 = vld [vmem:[#allocation7] sm:$0x1]
        %v725 = vlaneseq
        %v726 = vshrl.u32 %v725, 7
        %v727 = vsub.s32 0, %v726
        %v728 = vrot.slane %v723, %v727
        %v730 = vadd.f32 %v728, 0.0
        %v731 = vrot.slane %v721, 7
        %v732 = vrot.slane %v722, 7
        %v733 = vsel %vm535, %v731, %v732
        %v734 = vsel %vm535, %v732, %v731
        %v735 = vsel %vm540, %v734, 0.0
        %v736 = vsel %vm541, %v733, 0.0
        %v737 = vld [vmem:[%s3] sm:$0xff]
        %vm738 = vcmask 64512
        %v740 = vsel %vm738, %v735, 0
        %v743 = vsel %vm738, %v736, 0
        %745 = vmatprep.subr.mxu0 0.0
        %746 = vmatpush1.msra.mxu0 0.0
        %747 = vmatprep.subr.mxu0 0.0
        %748 = vmatpush1.msra.mxu0 0.0
        %749 = vmatprep.subr.mxu0 0.0
        %750 = vmatpush1.msra.mxu0 0.0
        %751 = vmatprep.subr.mxu0 0.0
        %752 = vmatpush1.msra.mxu0 0.0
        %753 = vmatprep.subr.mxu0 0.0
        %754 = vmatpush1.msra.mxu0 0.0
        %755 = vmatprep.subr.mxu0 0.0
        %756 = vmatpush1.msra.mxu0 0.0
        %757 = vmatprep.subr.mxu0 0.0
        %758 = vmatpush1.msra.mxu0 0.0
        %759 = vmatprep.subr.mxu0 0.0
        %760 = vmatpush1.msra.mxu0 0.0
        %761 = vmatprep.subr.mxu0 0.0
        %762 = vmatpush1.msra.mxu0 0.0
        %763 = vmatprep.subr.mxu0 0.0
        %764 = vmatpush1.msra.mxu0 0.0
        %765 = vmatprep.subr.mxu0 0.0
        %766 = vmatpush1.msra.mxu0 0.0
        %767 = vmatprep.subr.mxu0 0.0
        %768 = vmatpush1.msra.mxu0 0.0
        %769 = vmatprep.subr.mxu0 0.0
        %770 = vmatpush1.msra.mxu0 0.0
        %771 = vmatprep.subr.mxu0 0.0
        %772 = vmatpush1.msra.mxu0 0.0
        %773 = vmatprep.subr.mxu0 0.0
        %774 = vmatpush1.msra.mxu0 0.0
        %775 = vmatprep.subr.mxu0 0.0
        %776 = vmatpush1.msra.mxu0 %v737
        %777 = vmatprep.subr.mxu0 0.0
        %778 = vmatpush2.msra.mxu0 0.0
        %779 = vmatprep.subr.mxu0 0.0
        %780 = vmatpush2.msra.mxu0 0.0
        %781 = vmatprep.subr.mxu0 0.0
        %782 = vmatpush2.msra.mxu0 0.0
        %783 = vmatprep.subr.mxu0 0.0
        %784 = vmatpush2.msra.mxu0 0.0
        %785 = vmatprep.subr.mxu0 0.0
        %786 = vmatpush2.msra.mxu0 0.0
        %787 = vmatprep.subr.mxu0 0.0
        %788 = vmatpush2.msra.mxu0 0.0
        %789 = vmatprep.subr.mxu0 0.0
        %790 = vmatpush2.msra.mxu0 0.0
        %791 = vmatprep.subr.mxu0 0.0
        %792 = vmatpush2.msra.mxu0 0.0
        %793 = vmatprep.subr.mxu0 0.0
        %794 = vmatpush2.msra.mxu0 0.0
        %795 = vmatprep.subr.mxu0 0.0
        %796 = vmatpush2.msra.mxu0 0.0
        %797 = vmatprep.subr.mxu0 0.0
        %798 = vmatpush2.msra.mxu0 0.0
        %799 = vmatprep.subr.mxu0 0.0
        %800 = vmatpush2.msra.mxu0 0.0
        %801 = vmatprep.subr.mxu0 0.0
        %802 = vmatpush2.msra.mxu0 0.0
        %803 = vmatprep.subr.mxu0 0.0
        %804 = vmatpush2.msra.mxu0 0.0
        %805 = vmatprep.subr.mxu0 0.0
        %806 = vmatpush2.msra.mxu0 0.0
        %807 = vmatprep.subr.mxu0 0.0
        %808 = vmatpush2.msra.mxu0 0.0
        %809 = vmatprep.mubr.f32.mxu0 0.0
        %810 = vmatmul.mubr.f32.gmra.mxu0 %v740
        %v811 = vpop.f32.mrf.mxu0
        %v812 = vadd.f32 0.0, %v811
        %v813 = vpop.f32.mrf.mxu0
        %814 = vmatprep.mubr.f32.mxu0 0.0
        %815 = vmatmul.mubr.f32.gmra.mxu0 %v743
        %v816 = vpop.f32.mrf.mxu0
        %v817 = vadd.f32 0.0, %v816
        %v818 = vpop.f32.mrf.mxu0
        %819 = vdwg.mxu0
        %v820 = vadd.f32 %v730, %v812
        %v821 = vadd.f32 %v730, %v817
        %s822 = scalar_lea.vmem %s3, 8
        %v823 = vld [vmem:[%s822] sm:$0xff]
        %v825 = vsel %vm738, %v721, 0
        %v828 = vsel %vm738, %v722, 0
        %830 = vmatprep.subr.mxu0 0.0
        %831 = vmatpush1.msra.mxu0 0.0
        %832 = vmatprep.subr.mxu0 0.0
        %833 = vmatpush1.msra.mxu0 0.0
        %834 = vmatprep.subr.mxu0 0.0
        %835 = vmatpush1.msra.mxu0 0.0
        %836 = vmatprep.subr.mxu0 0.0
        %837 = vmatpush1.msra.mxu0 0.0
        %838 = vmatprep.subr.mxu0 0.0
        %839 = vmatpush1.msra.mxu0 0.0
        %840 = vmatprep.subr.mxu0 0.0
        %841 = vmatpush1.msra.mxu0 0.0
        %842 = vmatprep.subr.mxu0 0.0
        %843 = vmatpush1.msra.mxu0 0.0
        %844 = vmatprep.subr.mxu0 0.0
        %845 = vmatpush1.msra.mxu0 0.0
        %846 = vmatprep.subr.mxu0 0.0
        %847 = vmatpush1.msra.mxu0 0.0
        %848 = vmatprep.subr.mxu0 0.0
        %849 = vmatpush1.msra.mxu0 0.0
        %850 = vmatprep.subr.mxu0 0.0
        %851 = vmatpush1.msra.mxu0 0.0
        %852 = vmatprep.subr.mxu0 0.0
        %853 = vmatpush1.msra.mxu0 0.0
        %854 = vmatprep.subr.mxu0 0.0
        %855 = vmatpush1.msra.mxu0 0.0
        %856 = vmatprep.subr.mxu0 0.0
        %857 = vmatpush1.msra.mxu0 0.0
        %858 = vmatprep.subr.mxu0 0.0
        %859 = vmatpush1.msra.mxu0 0.0
        %860 = vmatprep.subr.mxu0 0.0
        %861 = vmatpush1.msra.mxu0 %v823
        %862 = vmatprep.subr.mxu0 0.0
        %863 = vmatpush2.msra.mxu0 0.0
        %864 = vmatprep.subr.mxu0 0.0
        %865 = vmatpush2.msra.mxu0 0.0
        %866 = vmatprep.subr.mxu0 0.0
        %867 = vmatpush2.msra.mxu0 0.0
        %868 = vmatprep.subr.mxu0 0.0
        %869 = vmatpush2.msra.mxu0 0.0
        %870 = vmatprep.subr.mxu0 0.0
        %871 = vmatpush2.msra.mxu0 0.0
        %872 = vmatprep.subr.mxu0 0.0
        %873 = vmatpush2.msra.mxu0 0.0
        %874 = vmatprep.subr.mxu0 0.0
        %875 = vmatpush2.msra.mxu0 0.0
        %876 = vmatprep.subr.mxu0 0.0
        %877 = vmatpush2.msra.mxu0 0.0
        %878 = vmatprep.subr.mxu0 0.0
        %879 = vmatpush2.msra.mxu0 0.0
        %880 = vmatprep.subr.mxu0 0.0
        %881 = vmatpush2.msra.mxu0 0.0
        %882 = vmatprep.subr.mxu0 0.0
        %883 = vmatpush2.msra.mxu0 0.0
        %884 = vmatprep.subr.mxu0 0.0
        %885 = vmatpush2.msra.mxu0 0.0
        %886 = vmatprep.subr.mxu0 0.0
        %887 = vmatpush2.msra.mxu0 0.0
        %888 = vmatprep.subr.mxu0 0.0
        %889 = vmatpush2.msra.mxu0 0.0
        %890 = vmatprep.subr.mxu0 0.0
        %891 = vmatpush2.msra.mxu0 0.0
        %892 = vmatprep.subr.mxu0 0.0
        %893 = vmatpush2.msra.mxu0 0.0
        %894 = vmatprep.mubr.f32.mxu0 0.0
        %895 = vmatmul.mubr.f32.gmra.mxu0 %v825
        %v896 = vpop.f32.mrf.mxu0
        %v897 = vadd.f32 0.0, %v896
        %v898 = vpop.f32.mrf.mxu0
        %899 = vmatprep.mubr.f32.mxu0 0.0
        %900 = vmatmul.mubr.f32.gmra.mxu0 %v828
        %v901 = vpop.f32.mrf.mxu0
        %v902 = vadd.f32 0.0, %v901
        %v903 = vpop.f32.mrf.mxu0
        %904 = vdwg.mxu0
        %v905 = vadd.f32 %v820, %v897
        %v906 = vadd.f32 %v821, %v902
        %v907 = vmax.f32 %v905, 0.0
        %v908 = vmax.f32 %v906, 0.0
        %v909 = vld [vmem:[#allocation8] sm:$0xf]
        %v910 = vld [vmem:[#allocation10] sm:$0x1]
        %v912 = vlaneseq
        %v913 = vshrl.u32 %v912, 7
        %v914 = vsub.s32 0, %v913
        %v915 = vrot.slane %v910, %v914
        %v918 = vsel %vm552, %v909, 0
        %920 = vmatprep.subr.mxu0 0.0
        %921 = vmatpush1.msra.mxu0 0.0
        %922 = vmatprep.subr.mxu0 0.0
        %923 = vmatpush1.msra.mxu0 0.0
        %924 = vmatprep.subr.mxu0 0.0
        %925 = vmatpush1.msra.mxu0 0.0
        %926 = vmatprep.subr.mxu0 0.0
        %927 = vmatpush1.msra.mxu0 0.0
        %928 = vmatprep.subr.mxu0 0.0
        %929 = vmatpush1.msra.mxu0 0.0
        %930 = vmatprep.subr.mxu0 0.0
        %931 = vmatpush1.msra.mxu0 0.0
        %932 = vmatprep.subr.mxu0 0.0
        %933 = vmatpush1.msra.mxu0 0.0
        %934 = vmatprep.subr.mxu0 0.0
        %935 = vmatpush1.msra.mxu0 0.0
        %936 = vmatprep.subr.mxu0 0.0
        %937 = vmatpush1.msra.mxu0 0.0
        %938 = vmatprep.subr.mxu0 0.0
        %939 = vmatpush1.msra.mxu0 0.0
        %940 = vmatprep.subr.mxu0 0.0
        %941 = vmatpush1.msra.mxu0 0.0
        %942 = vmatprep.subr.mxu0 0.0
        %943 = vmatpush1.msra.mxu0 0.0
        %944 = vmatprep.subr.mxu0 0.0
        %945 = vmatpush1.msra.mxu0 0.0
        %946 = vmatprep.subr.mxu0 0.0
        %947 = vmatpush1.msra.mxu0 0.0
        %948 = vmatprep.subr.mxu0 0.0
        %949 = vmatpush1.msra.mxu0 0.0
        %950 = vmatprep.subr.mxu0 0.0
        %951 = vmatpush1.msra.mxu0 %v918
        %952 = vmatprep.subr.mxu0 0.0
        %953 = vmatpush2.msra.mxu0 0.0
        %954 = vmatprep.subr.mxu0 0.0
        %955 = vmatpush2.msra.mxu0 0.0
        %956 = vmatprep.subr.mxu0 0.0
        %957 = vmatpush2.msra.mxu0 0.0
        %958 = vmatprep.subr.mxu0 0.0
        %959 = vmatpush2.msra.mxu0 0.0
        %960 = vmatprep.subr.mxu0 0.0
        %961 = vmatpush2.msra.mxu0 0.0
        %962 = vmatprep.subr.mxu0 0.0
        %963 = vmatpush2.msra.mxu0 0.0
        %964 = vmatprep.subr.mxu0 0.0
        %965 = vmatpush2.msra.mxu0 0.0
        %966 = vmatprep.subr.mxu0 0.0
        %967 = vmatpush2.msra.mxu0 0.0
        %968 = vmatprep.subr.mxu0 0.0
        %969 = vmatpush2.msra.mxu0 0.0
        %970 = vmatprep.subr.mxu0 0.0
        %971 = vmatpush2.msra.mxu0 0.0
        %972 = vmatprep.subr.mxu0 0.0
        %973 = vmatpush2.msra.mxu0 0.0
        %974 = vmatprep.subr.mxu0 0.0
        %975 = vmatpush2.msra.mxu0 0.0
        %976 = vmatprep.subr.mxu0 0.0
        %977 = vmatpush2.msra.mxu0 0.0
        %978 = vmatprep.subr.mxu0 0.0
        %979 = vmatpush2.msra.mxu0 0.0
        %980 = vmatprep.subr.mxu0 0.0
        %981 = vmatpush2.msra.mxu0 0.0
        %982 = vmatprep.subr.mxu0 0.0
        %983 = vmatpush2.msra.mxu0 0.0
        %984 = vmatprep.mubr.f32.mxu0 0.0
        %985 = vmatmul.mubr.f32.gmra.mxu0 %v636
        %v986 = vpop.f32.mrf.mxu0
        %v987 = vadd.f32 %v915, %v986
        %v988 = vpop.f32.mrf.mxu0
        %989 = vmatprep.mubr.f32.mxu0 0.0
        %990 = vmatmul.mubr.f32.gmra.mxu0 %v639
        %v991 = vpop.f32.mrf.mxu0
        %v992 = vadd.f32 %v915, %v991
        %v993 = vpop.f32.mrf.mxu0
        %994 = vdwg.mxu0
        %v995 = vadd.f32 %v907, %v987
        %v996 = vadd.f32 %v908, %v992
        %v997 = vmax.f32 %v995, 0.0
        %v998 = vmax.f32 %v996, 0.0
        %v999 = vld [vmem:[#allocation11] sm:$0x1]
        %v1001 = vlaneseq
        %v1002 = vshrl.u32 %v1001, 7
        %v1003 = vsub.s32 0, %v1002
        %v1004 = vrot.slane %v999, %v1003
        %v1006 = vadd.f32 %v1004, 0.0
        %v1007 = vrot.slane %v997, 6
        %v1008 = vrot.slane %v998, 6
        %vm1009 = vcmp.lt.s32.totalorder %v519, 2
        %v1010 = vsel %vm1009, %v1007, %v1008
        %v1011 = vsel %vm1009, %v1008, %v1007
        %v1012 = vsel %vm523, 1, 0
        %v1013 = vsel %vm524, 1, 0
        %vm1014 = vcmp.eq.s32.totalorder %v1012, 1
        %vm1015 = vcmp.eq.s32.totalorder %v1013, 1
        %v1016 = vsel %vm1014, %v1011, 0.0
        %v1017 = vsel %vm1015, %v1010, 0.0
        %v1018 = vld [vmem:[%s7] sm:$0xff]
        %v1020 = vsel %vm738, %v1016, 0
        %v1023 = vsel %vm738, %v1017, 0
        %1025 = vmatprep.subr.mxu0 0.0
        %1026 = vmatpush1.msra.mxu0 0.0
        %1027 = vmatprep.subr.mxu0 0.0
        %1028 = vmatpush1.msra.mxu0 0.0
        %1029 = vmatprep.subr.mxu0 0.0
        %1030 = vmatpush1.msra.mxu0 0.0
        %1031 = vmatprep.subr.mxu0 0.0
        %1032 = vmatpush1.msra.mxu0 0.0
        %1033 = vmatprep.subr.mxu0 0.0
        %1034 = vmatpush1.msra.mxu0 0.0
        %1035 = vmatprep.subr.mxu0 0.0
        %1036 = vmatpush1.msra.mxu0 0.0
        %1037 = vmatprep.subr.mxu0 0.0
        %1038 = vmatpush1.msra.mxu0 0.0
        %1039 = vmatprep.subr.mxu0 0.0
        %1040 = vmatpush1.msra.mxu0 0.0
        %1041 = vmatprep.subr.mxu0 0.0
        %1042 = vmatpush1.msra.mxu0 0.0
        %1043 = vmatprep.subr.mxu0 0.0
        %1044 = vmatpush1.msra.mxu0 0.0
        %1045 = vmatprep.subr.mxu0 0.0
        %1046 = vmatpush1.msra.mxu0 0.0
        %1047 = vmatprep.subr.mxu0 0.0
        %1048 = vmatpush1.msra.mxu0 0.0
        %1049 = vmatprep.subr.mxu0 0.0
        %1050 = vmatpush1.msra.mxu0 0.0
        %1051 = vmatprep.subr.mxu0 0.0
        %1052 = vmatpush1.msra.mxu0 0.0
        %1053 = vmatprep.subr.mxu0 0.0
        %1054 = vmatpush1.msra.mxu0 0.0
        %1055 = vmatprep.subr.mxu0 0.0
        %1056 = vmatpush1.msra.mxu0 %v1018
        %1057 = vmatprep.subr.mxu0 0.0
        %1058 = vmatpush2.msra.mxu0 0.0
        %1059 = vmatprep.subr.mxu0 0.0
        %1060 = vmatpush2.msra.mxu0 0.0
        %1061 = vmatprep.subr.mxu0 0.0
        %1062 = vmatpush2.msra.mxu0 0.0
        %1063 = vmatprep.subr.mxu0 0.0
        %1064 = vmatpush2.msra.mxu0 0.0
        %1065 = vmatprep.subr.mxu0 0.0
        %1066 = vmatpush2.msra.mxu0 0.0
        %1067 = vmatprep.subr.mxu0 0.0
        %1068 = vmatpush2.msra.mxu0 0.0
        %1069 = vmatprep.subr.mxu0 0.0
        %1070 = vmatpush2.msra.mxu0 0.0
        %1071 = vmatprep.subr.mxu0 0.0
        %1072 = vmatpush2.msra.mxu0 0.0
        %1073 = vmatprep.subr.mxu0 0.0
        %1074 = vmatpush2.msra.mxu0 0.0
        %1075 = vmatprep.subr.mxu0 0.0
        %1076 = vmatpush2.msra.mxu0 0.0
        %1077 = vmatprep.subr.mxu0 0.0
        %1078 = vmatpush2.msra.mxu0 0.0
        %1079 = vmatprep.subr.mxu0 0.0
        %1080 = vmatpush2.msra.mxu0 0.0
        %1081 = vmatprep.subr.mxu0 0.0
        %1082 = vmatpush2.msra.mxu0 0.0
        %1083 = vmatprep.subr.mxu0 0.0
        %1084 = vmatpush2.msra.mxu0 0.0
        %1085 = vmatprep.subr.mxu0 0.0
        %1086 = vmatpush2.msra.mxu0 0.0
        %1087 = vmatprep.subr.mxu0 0.0
        %1088 = vmatpush2.msra.mxu0 0.0
        %1089 = vmatprep.mubr.f32.mxu0 0.0
        %1090 = vmatmul.mubr.f32.gmra.mxu0 %v1020
        %v1091 = vpop.f32.mrf.mxu0
        %v1092 = vadd.f32 0.0, %v1091
        %v1093 = vpop.f32.mrf.mxu0
        %1094 = vmatprep.mubr.f32.mxu0 0.0
        %1095 = vmatmul.mubr.f32.gmra.mxu0 %v1023
        %v1096 = vpop.f32.mrf.mxu0
        %v1097 = vadd.f32 0.0, %v1096
        %v1098 = vpop.f32.mrf.mxu0
        %1099 = vdwg.mxu0
        %v1100 = vadd.f32 %v1006, %v1092
        %v1101 = vadd.f32 %v1006, %v1097
        %s1102 = scalar_lea.vmem %s7, 8
        %v1103 = vld [vmem:[%s1102] sm:$0xff]
        %v1105 = vsel %vm738, %v997, 0
        %v1108 = vsel %vm738, %v998, 0
        %1110 = vmatprep.subr.mxu0 0.0
        %1111 = vmatpush1.msra.mxu0 0.0
        %1112 = vmatprep.subr.mxu0 0.0
        %1113 = vmatpush1.msra.mxu0 0.0
        %1114 = vmatprep.subr.mxu0 0.0
        %1115 = vmatpush1.msra.mxu0 0.0
        %1116 = vmatprep.subr.mxu0 0.0
        %1117 = vmatpush1.msra.mxu0 0.0
        %1118 = vmatprep.subr.mxu0 0.0
        %1119 = vmatpush1.msra.mxu0 0.0
        %1120 = vmatprep.subr.mxu0 0.0
        %1121 = vmatpush1.msra.mxu0 0.0
        %1122 = vmatprep.subr.mxu0 0.0
        %1123 = vmatpush1.msra.mxu0 0.0
        %1124 = vmatprep.subr.mxu0 0.0
        %1125 = vmatpush1.msra.mxu0 0.0
        %1126 = vmatprep.subr.mxu0 0.0
        %1127 = vmatpush1.msra.mxu0 0.0
        %1128 = vmatprep.subr.mxu0 0.0
        %1129 = vmatpush1.msra.mxu0 0.0
        %1130 = vmatprep.subr.mxu0 0.0
        %1131 = vmatpush1.msra.mxu0 0.0
        %1132 = vmatprep.subr.mxu0 0.0
        %1133 = vmatpush1.msra.mxu0 0.0
        %1134 = vmatprep.subr.mxu0 0.0
        %1135 = vmatpush1.msra.mxu0 0.0
        %1136 = vmatprep.subr.mxu0 0.0
        %1137 = vmatpush1.msra.mxu0 0.0
        %1138 = vmatprep.subr.mxu0 0.0
        %1139 = vmatpush1.msra.mxu0 0.0
        %1140 = vmatprep.subr.mxu0 0.0
        %1141 = vmatpush1.msra.mxu0 %v1103
        %1142 = vmatprep.subr.mxu0 0.0
        %1143 = vmatpush2.msra.mxu0 0.0
        %1144 = vmatprep.subr.mxu0 0.0
        %1145 = vmatpush2.msra.mxu0 0.0
        %1146 = vmatprep.subr.mxu0 0.0
        %1147 = vmatpush2.msra.mxu0 0.0
        %1148 = vmatprep.subr.mxu0 0.0
        %1149 = vmatpush2.msra.mxu0 0.0
        %1150 = vmatprep.subr.mxu0 0.0
        %1151 = vmatpush2.msra.mxu0 0.0
        %1152 = vmatprep.subr.mxu0 0.0
        %1153 = vmatpush2.msra.mxu0 0.0
        %1154 = vmatprep.subr.mxu0 0.0
        %1155 = vmatpush2.msra.mxu0 0.0
        %1156 = vmatprep.subr.mxu0 0.0
        %1157 = vmatpush2.msra.mxu0 0.0
        %1158 = vmatprep.subr.mxu0 0.0
        %1159 = vmatpush2.msra.mxu0 0.0
        %1160 = vmatprep.subr.mxu0 0.0
        %1161 = vmatpush2.msra.mxu0 0.0
        %1162 = vmatprep.subr.mxu0 0.0
        %1163 = vmatpush2.msra.mxu0 0.0
        %1164 = vmatprep.subr.mxu0 0.0
        %1165 = vmatpush2.msra.mxu0 0.0
        %1166 = vmatprep.subr.mxu0 0.0
        %1167 = vmatpush2.msra.mxu0 0.0
        %1168 = vmatprep.subr.mxu0 0.0
        %1169 = vmatpush2.msra.mxu0 0.0
        %1170 = vmatprep.subr.mxu0 0.0
        %1171 = vmatpush2.msra.mxu0 0.0
        %1172 = vmatprep.subr.mxu0 0.0
        %1173 = vmatpush2.msra.mxu0 0.0
        %1174 = vmatprep.mubr.f32.mxu0 0.0
        %1175 = vmatmul.mubr.f32.gmra.mxu0 %v1105
        %v1176 = vpop.f32.mrf.mxu0
        %v1177 = vadd.f32 0.0, %v1176
        %v1178 = vpop.f32.mrf.mxu0
        %1179 = vmatprep.mubr.f32.mxu0 0.0
        %1180 = vmatmul.mubr.f32.gmra.mxu0 %v1108
        %v1181 = vpop.f32.mrf.mxu0
        %v1182 = vadd.f32 0.0, %v1181
        %v1183 = vpop.f32.mrf.mxu0
        %1184 = vdwg.mxu0
        %v1185 = vadd.f32 %v1100, %v1177
        %v1186 = vadd.f32 %v1101, %v1182
        %v1187 = vmax.f32 %v1185, 0.0
        %v1188 = vmax.f32 %v1186, 0.0
        %v1189 = vld [vmem:[%s10] sm:$0x1]
        %v1191 = vlaneseq
        %v1192 = vshrl.u32 %v1191, 7
        %v1193 = vsub.s32 0, %v1192
        %v1194 = vrot.slane %v1189, %v1193
        %v1196 = vadd.f32 %v1194, 0.0
        %v1197 = vrot.slane %v1187, 6
        %v1198 = vrot.slane %v1188, 6
        %v1199 = vsel %vm1009, %v1197, %v1198
        %v1200 = vsel %vm1009, %v1198, %v1197
        %v1201 = vsel %vm1014, %v1200, 0.0
        %v1202 = vsel %vm1015, %v1199, 0.0
        %v1203 = vld [vmem:[%s9] sm:$0xff]
        %v1205 = vsel %vm738, %v1201, 0
        %v1208 = vsel %vm738, %v1202, 0
        %1210 = vmatprep.subr.mxu0 0.0
        %1211 = vmatpush1.msra.mxu0 0.0
        %1212 = vmatprep.subr.mxu0 0.0
        %1213 = vmatpush1.msra.mxu0 0.0
        %1214 = vmatprep.subr.mxu0 0.0
        %1215 = vmatpush1.msra.mxu0 0.0
        %1216 = vmatprep.subr.mxu0 0.0
        %1217 = vmatpush1.msra.mxu0 0.0
        %1218 = vmatprep.subr.mxu0 0.0
        %1219 = vmatpush1.msra.mxu0 0.0
        %1220 = vmatprep.subr.mxu0 0.0
        %1221 = vmatpush1.msra.mxu0 0.0
        %1222 = vmatprep.subr.mxu0 0.0
        %1223 = vmatpush1.msra.mxu0 0.0
        %1224 = vmatprep.subr.mxu0 0.0
        %1225 = vmatpush1.msra.mxu0 0.0
        %1226 = vmatprep.subr.mxu0 0.0
        %1227 = vmatpush1.msra.mxu0 0.0
        %1228 = vmatprep.subr.mxu0 0.0
        %1229 = vmatpush1.msra.mxu0 0.0
        %1230 = vmatprep.subr.mxu0 0.0
        %1231 = vmatpush1.msra.mxu0 0.0
        %1232 = vmatprep.subr.mxu0 0.0
        %1233 = vmatpush1.msra.mxu0 0.0
        %1234 = vmatprep.subr.mxu0 0.0
        %1235 = vmatpush1.msra.mxu0 0.0
        %1236 = vmatprep.subr.mxu0 0.0
        %1237 = vmatpush1.msra.mxu0 0.0
        %1238 = vmatprep.subr.mxu0 0.0
        %1239 = vmatpush1.msra.mxu0 0.0
        %1240 = vmatprep.subr.mxu0 0.0
        %1241 = vmatpush1.msra.mxu0 %v1203
        %1242 = vmatprep.subr.mxu0 0.0
        %1243 = vmatpush2.msra.mxu0 0.0
        %1244 = vmatprep.subr.mxu0 0.0
        %1245 = vmatpush2.msra.mxu0 0.0
        %1246 = vmatprep.subr.mxu0 0.0
        %1247 = vmatpush2.msra.mxu0 0.0
        %1248 = vmatprep.subr.mxu0 0.0
        %1249 = vmatpush2.msra.mxu0 0.0
        %1250 = vmatprep.subr.mxu0 0.0
        %1251 = vmatpush2.msra.mxu0 0.0
        %1252 = vmatprep.subr.mxu0 0.0
        %1253 = vmatpush2.msra.mxu0 0.0
        %1254 = vmatprep.subr.mxu0 0.0
        %1255 = vmatpush2.msra.mxu0 0.0
        %1256 = vmatprep.subr.mxu0 0.0
        %1257 = vmatpush2.msra.mxu0 0.0
        %1258 = vmatprep.subr.mxu0 0.0
        %1259 = vmatpush2.msra.mxu0 0.0
        %1260 = vmatprep.subr.mxu0 0.0
        %1261 = vmatpush2.msra.mxu0 0.0
        %1262 = vmatprep.subr.mxu0 0.0
        %1263 = vmatpush2.msra.mxu0 0.0
        %1264 = vmatprep.subr.mxu0 0.0
        %1265 = vmatpush2.msra.mxu0 0.0
        %1266 = vmatprep.subr.mxu0 0.0
        %1267 = vmatpush2.msra.mxu0 0.0
        %1268 = vmatprep.subr.mxu0 0.0
        %1269 = vmatpush2.msra.mxu0 0.0
        %1270 = vmatprep.subr.mxu0 0.0
        %1271 = vmatpush2.msra.mxu0 0.0
        %1272 = vmatprep.subr.mxu0 0.0
        %1273 = vmatpush2.msra.mxu0 0.0
        %1274 = vmatprep.mubr.f32.mxu0 0.0
        %1275 = vmatmul.mubr.f32.gmra.mxu0 %v1205
        %v1276 = vpop.f32.mrf.mxu0
        %v1277 = vpop.f32.mrf.mxu0
        %1278 = vmatprep.mubr.f32.mxu0 0.0
        %1279 = vmatmul.mubr.f32.gmra.mxu0 %v1208
        %v1280 = vpop.f32.mrf.mxu0
        %v1281 = vadd.f32 0.0, %v1280
        %v1282 = vpop.f32.mrf.mxu0
        %1283 = vdwg.mxu0
        %v1284 = vadd.f32 %v1196, %v1281
        %s1285 = scalar_lea.vmem %s9, 8
        %v1286 = vld [vmem:[%s1285] sm:$0xff]
        %v1288 = vsel %vm738, %v1187, 0
        %v1291 = vsel %vm738, %v1188, 0
        %1293 = vmatprep.subr.mxu0 0.0
        %1294 = vmatpush1.msra.mxu0 0.0
        %1295 = vmatprep.subr.mxu0 0.0
        %1296 = vmatpush1.msra.mxu0 0.0
        %1297 = vmatprep.subr.mxu0 0.0
        %1298 = vmatpush1.msra.mxu0 0.0
        %1299 = vmatprep.subr.mxu0 0.0
        %1300 = vmatpush1.msra.mxu0 0.0
        %1301 = vmatprep.subr.mxu0 0.0
        %1302 = vmatpush1.msra.mxu0 0.0
        %1303 = vmatprep.subr.mxu0 0.0
        %1304 = vmatpush1.msra.mxu0 0.0
        %1305 = vmatprep.subr.mxu0 0.0
        %1306 = vmatpush1.msra.mxu0 0.0
        %1307 = vmatprep.subr.mxu0 0.0
        %1308 = vmatpush1.msra.mxu0 0.0
        %1309 = vmatprep.subr.mxu0 0.0
        %1310 = vmatpush1.msra.mxu0 0.0
        %1311 = vmatprep.subr.mxu0 0.0
        %1312 = vmatpush1.msra.mxu0 0.0
        %1313 = vmatprep.subr.mxu0 0.0
        %1314 = vmatpush1.msra.mxu0 0.0
        %1315 = vmatprep.subr.mxu0 0.0
        %1316 = vmatpush1.msra.mxu0 0.0
        %1317 = vmatprep.subr.mxu0 0.0
        %1318 = vmatpush1.msra.mxu0 0.0
        %1319 = vmatprep.subr.mxu0 0.0
        %1320 = vmatpush1.msra.mxu0 0.0
        %1321 = vmatprep.subr.mxu0 0.0
        %1322 = vmatpush1.msra.mxu0 0.0
        %1323 = vmatprep.subr.mxu0 0.0
        %1324 = vmatpush1.msra.mxu0 %v1286
        %1325 = vmatprep.subr.mxu0 0.0
        %1326 = vmatpush2.msra.mxu0 0.0
        %1327 = vmatprep.subr.mxu0 0.0
        %1328 = vmatpush2.msra.mxu0 0.0
        %1329 = vmatprep.subr.mxu0 0.0
        %1330 = vmatpush2.msra.mxu0 0.0
        %1331 = vmatprep.subr.mxu0 0.0
        %1332 = vmatpush2.msra.mxu0 0.0
        %1333 = vmatprep.subr.mxu0 0.0
        %1334 = vmatpush2.msra.mxu0 0.0
        %1335 = vmatprep.subr.mxu0 0.0
        %1336 = vmatpush2.msra.mxu0 0.0
        %1337 = vmatprep.subr.mxu0 0.0
        %1338 = vmatpush2.msra.mxu0 0.0
        %1339 = vmatprep.subr.mxu0 0.0
        %1340 = vmatpush2.msra.mxu0 0.0
        %1341 = vmatprep.subr.mxu0 0.0
        %1342 = vmatpush2.msra.mxu0 0.0
        %1343 = vmatprep.subr.mxu0 0.0
        %1344 = vmatpush2.msra.mxu0 0.0
        %1345 = vmatprep.subr.mxu0 0.0
        %1346 = vmatpush2.msra.mxu0 0.0
        %1347 = vmatprep.subr.mxu0 0.0
        %1348 = vmatpush2.msra.mxu0 0.0
        %1349 = vmatprep.subr.mxu0 0.0
        %1350 = vmatpush2.msra.mxu0 0.0
        %1351 = vmatprep.subr.mxu0 0.0
        %1352 = vmatpush2.msra.mxu0 0.0
        %1353 = vmatprep.subr.mxu0 0.0
        %1354 = vmatpush2.msra.mxu0 0.0
        %1355 = vmatprep.subr.mxu0 0.0
        %1356 = vmatpush2.msra.mxu0 0.0
        %1357 = vmatprep.mubr.f32.mxu0 0.0
        %1358 = vmatmul.mubr.f32.gmra.mxu0 %v1288
        %v1359 = vpop.f32.mrf.mxu0
        %v1360 = vpop.f32.mrf.mxu0
        %1361 = vmatprep.mubr.f32.mxu0 0.0
        %1362 = vmatmul.mubr.f32.gmra.mxu0 %v1291
        %v1363 = vpop.f32.mrf.mxu0
        %v1364 = vadd.f32 0.0, %v1363
        %v1365 = vpop.f32.mrf.mxu0
        %1366 = vdwg.mxu0
        %v1367 = vadd.f32 %v1284, %v1364
        %v1368 = vmax.f32 %v1367, 0.0
        %v1369 = vadd.f32 %v1368, %v998
        %v1370 = vmax.f32 %v1369, 0.0
        %v1371 = vld [vmem:[%s11] sm:$0xff]
        %v1372 = vld [vmem:[%s12] sm:$0x1]
        %v1374 = vrot.slane %v1370, 7
        %v1375 = vsel %vm738, %v1374, 0
        %1377 = vmatprep.subr.mxu0 0.0
        %1378 = vmatpush1.msra.mxu0 0.0
        %1379 = vmatprep.subr.mxu0 0.0
        %1380 = vmatpush1.msra.mxu0 0.0
        %1381 = vmatprep.subr.mxu0 0.0
        %1382 = vmatpush1.msra.mxu0 0.0
        %1383 = vmatprep.subr.mxu0 0.0
        %1384 = vmatpush1.msra.mxu0 0.0
        %1385 = vmatprep.subr.mxu0 0.0
        %1386 = vmatpush1.msra.mxu0 0.0
        %1387 = vmatprep.subr.mxu0 0.0
        %1388 = vmatpush1.msra.mxu0 0.0
        %1389 = vmatprep.subr.mxu0 0.0
        %1390 = vmatpush1.msra.mxu0 0.0
        %1391 = vmatprep.subr.mxu0 0.0
        %1392 = vmatpush1.msra.mxu0 0.0
        %1393 = vmatprep.subr.mxu0 0.0
        %1394 = vmatpush1.msra.mxu0 0.0
        %1395 = vmatprep.subr.mxu0 0.0
        %1396 = vmatpush1.msra.mxu0 0.0
        %1397 = vmatprep.subr.mxu0 0.0
        %1398 = vmatpush1.msra.mxu0 0.0
        %1399 = vmatprep.subr.mxu0 0.0
        %1400 = vmatpush1.msra.mxu0 0.0
        %1401 = vmatprep.subr.mxu0 0.0
        %1402 = vmatpush1.msra.mxu0 0.0
        %1403 = vmatprep.subr.mxu0 0.0
        %1404 = vmatpush1.msra.mxu0 0.0
        %1405 = vmatprep.subr.mxu0 0.0
        %1406 = vmatpush1.msra.mxu0 0.0
        %1407 = vmatprep.subr.mxu0 0.0
        %1408 = vmatpush1.msra.mxu0 %v1371
        %1409 = vmatprep.subr.mxu0 0.0
        %1410 = vmatpush2.msra.mxu0 0.0
        %1411 = vmatprep.subr.mxu0 0.0
        %1412 = vmatpush2.msra.mxu0 0.0
        %1413 = vmatprep.subr.mxu0 0.0
        %1414 = vmatpush2.msra.mxu0 0.0
        %1415 = vmatprep.subr.mxu0 0.0
        %1416 = vmatpush2.msra.mxu0 0.0
        %1417 = vmatprep.subr.mxu0 0.0
        %1418 = vmatpush2.msra.mxu0 0.0
        %1419 = vmatprep.subr.mxu0 0.0
        %1420 = vmatpush2.msra.mxu0 0.0
        %1421 = vmatprep.subr.mxu0 0.0
        %1422 = vmatpush2.msra.mxu0 0.0
        %1423 = vmatprep.subr.mxu0 0.0
        %1424 = vmatpush2.msra.mxu0 0.0
        %1425 = vmatprep.subr.mxu0 0.0
        %1426 = vmatpush2.msra.mxu0 0.0
        %1427 = vmatprep.subr.mxu0 0.0
        %1428 = vmatpush2.msra.mxu0 0.0
        %1429 = vmatprep.subr.mxu0 0.0
        %1430 = vmatpush2.msra.mxu0 0.0
        %1431 = vmatprep.subr.mxu0 0.0
        %1432 = vmatpush2.msra.mxu0 0.0
        %1433 = vmatprep.subr.mxu0 0.0
        %1434 = vmatpush2.msra.mxu0 0.0
        %1435 = vmatprep.subr.mxu0 0.0
        %1436 = vmatpush2.msra.mxu0 0.0
        %1437 = vmatprep.subr.mxu0 0.0
        %1438 = vmatpush2.msra.mxu0 0.0
        %1439 = vmatprep.subr.mxu0 0.0
        %1440 = vmatpush2.msra.mxu0 0.0
        %1441 = vmatprep.mubr.f32.mxu0 0.0
        %1442 = vmatmul.mubr.f32.gmra.mxu0 %v1375
        %v1443 = vpop.f32.mrf.mxu0
        %v1444 = vadd.f32 %v1372, %v1443
        %v1445 = vpop.f32.mrf.mxu0
        %1446 = vdwg.mxu0
        %vm1447 = vcmask 40960
        %v1448 = vsel %vm1447, %v1444, -inf
        %1449 = vmax.xlane.f32.xlu0 %v1448
        %v1450 = vpop.xlane.xlu0 %1449
        %v1451 = vsub.f32 %v1444, %v1450
        %v1452 = vmul.f32 %v1451, 1.442695
        %v1453 = vpow.pop %v1452
        %v1454 = vsel %vm1447, %v1453, 0.0
        %1455 = vadd.xlane.f32.xlu0 %v1454
        %v1456 = vpop.xlane.xlu0 %1455
        %v1457 = vlog2.pop %v1456
        %v1458 = vmul.f32 %v1457, 0.6931472
        %v1459 = vsub.f32 %v1451, %v1458
        %1460 = vst.msk [vmem:[%s510] sm:$0x1] %vm1447, %v1459
        %s1461 = sand.u32 %s317, 1
        %s1462 = scalar_lea.sflag [#allocation4], %s1461
        %s1463 = sand.u32 %s317, 1
        %s1464 = scalar_lea.vmem [#allocation13], %s1463
        // Predicated region
        $region97: #{fwd.1} parent=71 // pred_check
          %p1465 = pneg %p327
        $region98: #{fwd.1} parent=71 // pred_check_branch
          %1467 = sbr.rel (%p1465) target = $region100
        $region99: #{fwd.1} parent=71 // pred_region
          %s1469 = ssub.s32 16, 16
          %1470 = vsyncadd %s1462, %s1469
          %s1471 = smul.addr %s31, 16
          %s1472 = scalar_lea.hbm %s13, %s1471
          %s1474 = sshll.u32 %s1464, 4
          %s1475 = int_to_ptr.vmem [resolvable:$true] %s1474
          %1477 = dma.vmem_to_hbm [thread:$0]  %s1475, 16, %s1472, %s1462
        $region100: #{fwd.1} parent=71 // pred_fallthru
          _
      $region72: #{fwd.1} parent=5 // pred_fallthru
        _
      %p1478 = scmp.le.s32.totalorder 2, %s26
      // Predicated region
      $region101: #{fwd.1} parent=5 // pred_check
        %p1479 = pneg %p1478
      $region102: #{fwd.1} parent=5 // pred_check_branch
        %1481 = sbr.rel (%p1479) target = $region104
      $region103: #{fwd.1} parent=5 // pred_region
        %s1482 = ssub.s32 %s26, 2
        // Predicated region
        $region105: #{fwd.1} parent=103 // pred_check
          %p1483 = pneg %p333
        $region106: #{fwd.1} parent=103 // pred_check_branch
          %1485 = sbr.rel (%p1483) target = $region108
        $region107: #{fwd.1} parent=103 // pred_region
          %s1486 = sand.u32 %s318, 1
          %s1487 = scalar_lea.sflag [#allocation4], %s1486
          %s1488 = sand.u32 %s318, 1
          %s1489 = scalar_lea.vmem [#allocation13], %s1488
          %1490 = dma.done %s1487, 16
        $region108: #{fwd.1} parent=103 // pred_fallthru
          _
      $region104: #{fwd.1} parent=5 // pred_fallthru
        _
    $region6: #{fwd.1} parent=1 // loop_footer
      %s30 = sadd.s32 1, %s26
    $region7: #{fwd.1} parent=1 // loop_footer_branch
      %25 = sbr.rel target = $region3
    $region8: #{fwd.1} parent=1 // loop_exit
      _
    %1491 = vsyncpa [#allocation3], 1
    %s1492 = scalar_lea.sflag [#allocation3], 1
    %1493 = vsyncpa %s1492, 1
    %1494 = vsyncpa [#allocation6], 1
    %1495 = vsyncpa [#allocation9], 1
    %1496 = vsyncpa [#allocation12], 1
    %1497 = vsyncpa [#allocation4], 1
    %s1498 = scalar_lea.sflag [#allocation4], 1
    %1499 = vsyncpa %s1498, 1

</llo_original>
